<compile_context>
chip_gen: v7x
topology: tpu7x:2x2x1
jax: 0.10.0
libtpu: 0.0.40
codegen_flags: <defaults>
</compile_context>

<pallas_src>
import jax
import jax.numpy as jnp
from jax.experimental import pallas as pl
from jax.experimental.pallas import tpu as pltpu

LANE = 128
SUBLANE = 8
MIN_PALLAS_BATCH = 64   # below this, plain XLA beats kernel launch overhead


def _round_up(x, m):
    return (x + m - 1) // m * m


def _gen_params():
    """Generation-aware tile cap / VMEM budget (conservative fallback if unknown)."""
    kind = ""
    try:
        kind = jax.devices()[0].device_kind.lower()
    except Exception:
        pass
    if "v7" in kind:
        # 64 MiB VMEM/TC, ~3.2 TB/s: bigger tiles amortize per-step overhead,
        # but leave headroom below physical VMEM for compiler scratch.
        return dict(row_cap=4096, tile_budget=36 << 20, vmem_ceiling=48 << 20)
    if "v6" in kind:
        return dict(row_cap=2048, tile_budget=56 << 20, vmem_ceiling=96 << 20)
    # v5e & unknown: bandwidth-starved, step overhead already small at 1024 rows.
    return dict(row_cap=1024, tile_budget=40 << 20, vmem_ceiling=96 << 20)


def _pick_tb(B, Kp, Np, x_itemsize, out_itemsize, tile_budget, row_cap):
    """Batch-tile rows: fit double-buffered x + out tiles (and resident W/bias)."""
    resident = 2 * Kp * Np * 4 + 2 * Np * 4           # W + bias (counted double-buffered)
    avail = max(tile_budget - resident, 2 << 20)
    per_row = 2 * Kp * x_itemsize + 2 * Np * out_itemsize
    tb = (avail // per_row) // SUBLANE * SUBLANE
    tb = min(tb, row_cap, (B // SUBLANE) * SUBLANE)   # block never exceeds the array rows
    return int(max(SUBLANE, tb))


def prepare_classifier_params(weight, bias, param_dtype=jnp.float32):
    """One-time parameter prep (outside the hot forward path).

    weight: (num_classes, clf) torch-Linear layout.
    Returns (w_t, b_row): (Kp, Npad) param_dtype and (1, Npad) f32, zero-padded,
    with Npad = 128 so output stores are lane-dense.
    """
    N, K = weight.shape
    Kp = _round_up(K, LANE)
    Np = _round_up(max(N, LANE), LANE)
    w_t = jnp.zeros((Kp, Np), param_dtype)
    w_t = w_t.at[:K, :N].set(jnp.transpose(weight).astype(param_dtype))
    b_row = jnp.zeros((1, Np), jnp.float32)
    b_row = b_row.at[:, :N].set(bias.astype(jnp.float32))
    return w_t, b_row


def _linear_kernel(x_ref, w_ref, b_ref, o_ref):
    # x_ref: (TB, Kp) f32/bf16 streamed tile; w_ref: (Kp, Npad) VMEM-resident;
    # b_ref: (1, Npad) f32; o_ref: (TB, Npad) bf16.
    acc = jnp.dot(x_ref[...], w_ref[...], preferred_element_type=jnp.float32)
    o_ref[...] = (acc + b_ref[...]).astype(o_ref.dtype)


def finetune_classifier_forward(x, w_t, b_row, num_classes):
    """x: (B, C, H, W) features (f32 or bf16); w_t/b_row from prepare_classifier_params."""
    B = x.shape[0]
    x_flat = x.reshape(B, -1)                          # glue: row-major flatten
    K = x_flat.shape[1]
    Kp, Np = w_t.shape
    assert Kp == _round_up(K, LANE), "weight was prepared for a different 'clf' size"

    # Small-batch bypass: launch/pad/slice overhead exceeds the matmul itself.
    if B < MIN_PALLAS_BATCH:
        y = jnp.dot(x_flat, w_t[:K, :num_classes], preferred_element_type=jnp.float32)
        return (y + b_row[0, :num_classes]).astype(jnp.float32)

    if K == Kp:
        # Fast path: stream x_flat directly, no materialized pad/cast pre-pass.
        x_in = x_flat
    else:
        # K not lane-aligned: garbage K columns would pollute the reduction,
        # so zero-pad the feature axis (rare; clf is normally a multiple of 128).
        x_in = jnp.zeros((B, Kp), x_flat.dtype).at[:, :K].set(x_flat)

    gen = _gen_params()
    x_itemsize = jnp.dtype(x_in.dtype).itemsize
    out_itemsize = 2                                   # bf16 writeback
    tb = _pick_tb(B, Kp, Np, x_itemsize, out_itemsize,
                  gen["tile_budget"], gen["row_cap"])
    grid = pl.cdiv(B, tb)

    # Honest VMEM requirement: double-buffered x/out tiles + resident W/bias + margin.
    need = (2 * tb * Kp * x_itemsize
            + 2 * tb * Np * out_itemsize
            + 2 * Kp * Np * jnp.dtype(w_t.dtype).itemsize
            + 2 * Np * 4)
    vmem_limit = int(min(max(need + (4 << 20), 32 << 20), gen["vmem_ceiling"]))

    out = pl.pallas_call(
        _linear_kernel,
        out_shape=jax.ShapeDtypeStruct((B, Np), jnp.bfloat16),
        grid_spec=pl.GridSpec(
            grid=(grid,),
            in_specs=[
                pl.BlockSpec((tb, Kp), lambda i: (i, 0)),   # streamed x tiles
                pl.BlockSpec((Kp, Np), lambda i: (0, 0)),   # W stays VMEM-resident
                pl.BlockSpec((1, Np), lambda i: (0, 0)),    # bias stays VMEM-resident
            ],
            out_specs=pl.BlockSpec((tb, Np), lambda i: (i, 0)),
        ),
        compiler_params=pltpu.CompilerParams(
            dimension_semantics=("parallel",),
            vmem_limit_bytes=vmem_limit,
        ),
    )(x_in, w_t, b_row)

    # Tiny slice; cast logits back to f32 for interface parity with the PyTorch module.
    return out[:, :num_classes].astype(jnp.float32)


if __name__ == "__main__":
    # Shapes consistent with the module: flattened feature dim == hparams['clf'].
    C, H, W = 4, 16, 16              # clf = C*H*W = 1024 (lane-aligned fast path)
    clf = C * H * W
    num_classes = 5

    key = jax.random.PRNGKey(0)
    kx1, kx2, kw, kb = jax.random.split(key, 4)

    # Deterministic synthetic "Linear" parameters (not a checkpoint load).
    weight = jax.random.normal(kw, (num_classes, clf), dtype=jnp.float32) * 0.1
    bias = jax.random.normal(kb, (num_classes,), dtype=jnp.float32) * 0.1

    # One-time param prep (transpose + lane-pad), outside the forward.
    w_t, b_row = prepare_classifier_params(weight, bias)

    # 1) Tiny fine-tuning batch (B=2) -> small-batch XLA bypass path.
    x_small = jax.random.normal(kx1, (2, C, H, W), dtype=jnp.float32)
    y_small = jax.block_until_ready(
        finetune_classifier_forward(x_small, w_t, b_row, num_classes))
    ref_small = x_small.reshape(2, -1) @ weight.T + bias
    assert y_small.shape == ref_small.shape, "shape mismatch (bypass path)"
    assert jnp.allclose(y_small, ref_small, atol=1e-2, rtol=1e-2), \
        "mismatch vs reference (bypass path)"

    # 2) Larger batch -> Pallas kernel path (streamed f32 x, bf16 writeback).
    B = 256
    x_big = jax.random.normal(kx2, (B, C, H, W), dtype=jnp.float32)
    y_big = jax.block_until_ready(
        finetune_classifier_forward(x_big, w_t, b_row, num_classes))
    ref_big = x_big.reshape(B, -1) @ weight.T + bias
    assert y_big.shape == ref_big.shape, "shape mismatch (Pallas path)"
    # Tolerance covers the final bf16 store of f32-accumulated logits.
    assert jnp.allclose(y_big, ref_big, atol=2e-2, rtol=2e-2), \
        "mismatch vs reference (Pallas path)"

    print("KERNEL_OK")
</pallas_src>

<mosaic_0001>
module attributes {stable_mosaic.version = 11 : i64} {
  func.func @_linear_kernel(%arg0: i32, %arg1: memref<256x1024xf32, #tpu.memory_space<vmem>>, %arg2: memref<1024x128xf32, #tpu.memory_space<vmem>>, %arg3: memref<1x128xf32, #tpu.memory_space<vmem>>, %arg4: memref<256x128xbf16, #tpu.memory_space<vmem>>) attributes {dimension_semantics = [#tpu.dimension_semantics<parallel>], iteration_bounds = array<i64: 1>, scalar_prefetch = 0 : i64, scratch_operands = 0 : i64, tpu.core_type = #tpu.core_type<tc>, window_params = [{transform_indices = @transform_0, window_bounds = array<i64: 256, 1024>}, {pipeline_mode = #tpu.pipeline_mode<synchronous>, transform_indices = @transform_1, window_bounds = array<i64: 1024, 128>}, {pipeline_mode = #tpu.pipeline_mode<synchronous>, transform_indices = @transform_2, window_bounds = array<i64: 1, 128>}, {transform_indices = @transform_3, window_bounds = array<i64: 256, 128>}]} {
    %c0 = arith.constant 0 : index
    %c0_0 = arith.constant 0 : index
    %0 = vector.load %arg1[%c0, %c0_0] : memref<256x1024xf32, #tpu.memory_space<vmem>>, vector<256x1024xf32>
    %c0_1 = arith.constant 0 : index
    %c0_2 = arith.constant 0 : index
    %1 = vector.load %arg2[%c0_1, %c0_2] : memref<1024x128xf32, #tpu.memory_space<vmem>>, vector<1024x128xf32>
    %cst = arith.constant dense<0.000000e+00> : vector<256x128xf32>
    %2 = tpu.matmul %0, %1, %cst {dimension_numbers = #tpu.dot_dimension_numbers<[1], [0], [0], [1], [0, 0, 1, 1], [], []>} : vector<256x1024xf32>, vector<1024x128xf32>, vector<256x128xf32> -> vector<256x128xf32>
    %c0_3 = arith.constant 0 : index
    %c0_4 = arith.constant 0 : index
    %3 = vector.load %arg3[%c0_3, %c0_4] : memref<1x128xf32, #tpu.memory_space<vmem>>, vector<1x128xf32>
    %4 = vector.broadcast %3 : vector<1x128xf32> to vector<256x128xf32>
    %5 = arith.addf %2, %4 : vector<256x128xf32>
    %6 = arith.truncf %5 : vector<256x128xf32> to vector<256x128xbf16>
    %c0_5 = arith.constant 0 : index
    %c0_6 = arith.constant 0 : index
    %7 = vector.load %arg4[%c0_5, %c0_6] : memref<256x128xbf16, #tpu.memory_space<vmem>>, vector<256x128xbf16>
    tpu.vector_store %arg4[%c0_5, %c0_6], %6 {strides = array<i32>} : memref<256x128xbf16, #tpu.memory_space<vmem>>, vector<256x128xbf16>,
    return
  }
  func.func @transform_0(%arg0: i32) -> (i32, i32) {
    %c0_i32 = arith.constant 0 : i32
    %c0_i32_0 = arith.constant 0 : i32
    return %arg0, %c0_i32 : i32, i32
  }
  func.func @transform_1(%arg0: i32) -> (i32, i32) {
    %c0_i32 = arith.constant 0 : i32
    %c0_i32_0 = arith.constant 0 : i32
    %c0_i32_1 = arith.constant 0 : i32
    return %c0_i32, %c0_i32_0 : i32, i32
  }
  func.func @transform_2(%arg0: i32) -> (i32, i32) {
    %c0_i32 = arith.constant 0 : i32
    %c0_i32_0 = arith.constant 0 : i32
    %c0_i32_1 = arith.constant 0 : i32
    return %c0_i32, %c0_i32_0 : i32, i32
  }
  func.func @transform_3(%arg0: i32) -> (i32, i32) {
    %c0_i32 = arith.constant 0 : i32
    %c0_i32_0 = arith.constant 0 : i32
    return %arg0, %c0_i32 : i32, i32
  }
}

</mosaic_0001>

<llo_original>
// kernel: tpu_custom_call.1
$region0: #{tpu_custom_call.1}
  #allocation0 [shape = 'u32[]', space=smem, size = 0x4, offset = 0x4, fixed_abs, tag = 'smem constant byte address 0x4 - core index']
  #allocation1 [shape = 'u32[144,128]{1,0:T(1,128)}', space=vmem, size = 0x12000, scoped, tag = 'internal scratch']
  %s0 = inlined_call_operand.hbm [shape: f32[256,1024], index: 0, kind: input, shape index: {}]
  %s1 = inlined_call_operand.hbm [shape: f32[1024,128], index: 1, kind: input, shape index: {}]
  %s2 = inlined_call_operand.vmem [shape: f32[1,128], index: 2, kind: input, shape index: {}]
  %s3 = inlined_call_operand.hbm [shape: bf16[256,128], index: 3, kind: output, shape index: {}]
  %s4 = sld [smem:[#allocation0]]
  $region30: #{tpu_custom_call.1} parent=0
    _
  %s6 = ssub.s32 1, %s4
  %s7 = scalar_select 0, %s6, %s4
  $region1: #{tpu_custom_call.1} parent=0
    #allocation2 [shape = 'u8[1048576]{0}', space=vmem, size = 0x100000, scoped, tag = 'input window, operand 0, single buffered']
    #allocation3 [shape = 's32[1]{0}', space=sflag, size = 0x4, scoped, tag = 'scoped memory for tpu_custom_call.1']
    #allocation4 [shape = 's32[1]{0}', space=sflag, size = 0x4, scoped, tag = 'scoped memory for tpu_custom_call.1']
    #allocation5 [shape = 'u8[524288]{0}', space=vmem, size = 0x80000, scoped, tag = 'input window, operand 1, single buffered']
    #allocation6 [shape = 's32[1]{0}', space=sflag, size = 0x4, scoped, tag = 'scoped memory for tpu_custom_call.1']
    #allocation7 [shape = 'u8[65536]{0}', space=vmem, size = 0x10000, scoped, tag = 'output window, operand 0, single buffered']
    %8 = vsyncpa [#allocation3], 0
    %9 = vsyncpa [#allocation6], 0
    %10 = vsyncpa [#allocation4], 0
    // Predicated region
    $region2: #{tpu_custom_call.1} parent=1 // pred_check
      _
    $region3: #{tpu_custom_call.1} parent=1 // pred_check_branch
      %12 = sbr.rel (0) target = $region5
    $region4: #{tpu_custom_call.1} parent=1 // pred_region
      %s14 = ssub.s32 32768, 32768
      %15 = vsyncadd [#allocation3], %s14
      %s16 = sshll.u32 [#allocation2], 4
      %s17 = int_to_ptr.vmem [resolvable:$true] %s16
      %22 = dma.hbm_to_vmem [thread:$0]  %s0, 32768, %s17, [#allocation3], 1024, 1024, 64
    $region5: #{tpu_custom_call.1} parent=1 // pred_fallthru
      _
    // Predicated region
    $region6: #{tpu_custom_call.1} parent=1 // pred_check
      _
    $region7: #{tpu_custom_call.1} parent=1 // pred_check_branch
      %24 = sbr.rel (0) target = $region9
    $region8: #{tpu_custom_call.1} parent=1 // pred_region
      %s26 = ssub.s32 16384, 16384
      %27 = vsyncadd [#allocation6], %s26
      %s28 = sshll.u32 [#allocation5], 4
      %s29 = int_to_ptr.vmem [resolvable:$true] %s28
      %34 = dma.hbm_to_vmem [thread:$0]  %s1, 16384, %s29, [#allocation6], 128, 128, 8
    $region9: #{tpu_custom_call.1} parent=1 // pred_fallthru
      _
    // Predicated region
    $region10: #{tpu_custom_call.1} parent=1 // pred_check
      _
    $region11: #{tpu_custom_call.1} parent=1 // pred_check_branch
      %36 = sbr.rel (0) target = $region13
    $region12: #{tpu_custom_call.1} parent=1 // pred_region
      _
    $region13: #{tpu_custom_call.1} parent=1 // pred_fallthru
      _
    // Predicated region
    $region14: #{tpu_custom_call.1} parent=1 // pred_check
      _
    $region15: #{tpu_custom_call.1} parent=1 // pred_check_branch
      %38 = sbr.rel (0) target = $region17
    $region16: #{tpu_custom_call.1} parent=1 // pred_region
      %39 = dma.done [#allocation3], 32768
    $region17: #{tpu_custom_call.1} parent=1 // pred_fallthru
      _
    // Predicated region
    $region18: #{tpu_custom_call.1} parent=1 // pred_check
      _
    $region19: #{tpu_custom_call.1} parent=1 // pred_check_branch
      %41 = sbr.rel (0) target = $region21
    $region20: #{tpu_custom_call.1} parent=1 // pred_region
      %42 = dma.done [#allocation6], 16384
    $region21: #{tpu_custom_call.1} parent=1 // pred_fallthru
      _
    %v43 = vld [vmem:[#allocation2] sm:$0xff]
    %v44 = vld [vmem:[#allocation2 + $0x8] sm:$0xff]
    %v45 = vld [vmem:[#allocation2 + $0x10] sm:$0xff]
    %v46 = vld [vmem:[#allocation2 + $0x18] sm:$0xff]
    %v47 = vld [vmem:[#allocation2 + $0x20] sm:$0xff]
    %v48 = vld [vmem:[#allocation2 + $0x28] sm:$0xff]
    %v49 = vld [vmem:[#allocation2 + $0x30] sm:$0xff]
    %v50 = vld [vmem:[#allocation2 + $0x38] sm:$0xff]
    %v51 = vld [vmem:[#allocation2 + $0x40] sm:$0xff]
    %v52 = vld [vmem:[#allocation2 + $0x48] sm:$0xff]
    %v53 = vld [vmem:[#allocation2 + $0x50] sm:$0xff]
    %v54 = vld [vmem:[#allocation2 + $0x58] sm:$0xff]
    %v55 = vld [vmem:[#allocation2 + $0x60] sm:$0xff]
    %v56 = vld [vmem:[#allocation2 + $0x68] sm:$0xff]
    %v57 = vld [vmem:[#allocation2 + $0x70] sm:$0xff]
    %v58 = vld [vmem:[#allocation2 + $0x78] sm:$0xff]
    %v59 = vld [vmem:[#allocation2 + $0x80] sm:$0xff]
    %v60 = vld [vmem:[#allocation2 + $0x88] sm:$0xff]
    %v61 = vld [vmem:[#allocation2 + $0x90] sm:$0xff]
    %v62 = vld [vmem:[#allocation2 + $0x98] sm:$0xff]
    %v63 = vld [vmem:[#allocation2 + $0xa0] sm:$0xff]
    %v64 = vld [vmem:[#allocation2 + $0xa8] sm:$0xff]
    %v65 = vld [vmem:[#allocation2 + $0xb0] sm:$0xff]
    %v66 = vld [vmem:[#allocation2 + $0xb8] sm:$0xff]
    %v67 = vld [vmem:[#allocation2 + $0xc0] sm:$0xff]
    %v68 = vld [vmem:[#allocation2 + $0xc8] sm:$0xff]
    %v69 = vld [vmem:[#allocation2 + $0xd0] sm:$0xff]
    %v70 = vld [vmem:[#allocation2 + $0xd8] sm:$0xff]
    %v71 = vld [vmem:[#allocation2 + $0xe0] sm:$0xff]
    %v72 = vld [vmem:[#allocation2 + $0xe8] sm:$0xff]
    %v73 = vld [vmem:[#allocation2 + $0xf0] sm:$0xff]
    %v74 = vld [vmem:[#allocation2 + $0xf8] sm:$0xff]
    %v75 = vld [vmem:[#allocation2 + $0x100] sm:$0xff]
    %v76 = vld [vmem:[#allocation2 + $0x108] sm:$0xff]
    %v77 = vld [vmem:[#allocation2 + $0x110] sm:$0xff]
    %v78 = vld [vmem:[#allocation2 + $0x118] sm:$0xff]
    %v79 = vld [vmem:[#allocation2 + $0x120] sm:$0xff]
    %v80 = vld [vmem:[#allocation2 + $0x128] sm:$0xff]
    %v81 = vld [vmem:[#allocation2 + $0x130] sm:$0xff]
    %v82 = vld [vmem:[#allocation2 + $0x138] sm:$0xff]
    %v83 = vld [vmem:[#allocation2 + $0x140] sm:$0xff]
    %v84 = vld [vmem:[#allocation2 + $0x148] sm:$0xff]
    %v85 = vld [vmem:[#allocation2 + $0x150] sm:$0xff]
    %v86 = vld [vmem:[#allocation2 + $0x158] sm:$0xff]
    %v87 = vld [vmem:[#allocation2 + $0x160] sm:$0xff]
    %v88 = vld [vmem:[#allocation2 + $0x168] sm:$0xff]
    %v89 = vld [vmem:[#allocation2 + $0x170] sm:$0xff]
    %v90 = vld [vmem:[#allocation2 + $0x178] sm:$0xff]
    %v91 = vld [vmem:[#allocation2 + $0x180] sm:$0xff]
    %v92 = vld [vmem:[#allocation2 + $0x188] sm:$0xff]
    %v93 = vld [vmem:[#allocation2 + $0x190] sm:$0xff]
    %v94 = vld [vmem:[#allocation2 + $0x198] sm:$0xff]
    %v95 = vld [vmem:[#allocation2 + $0x1a0] sm:$0xff]
    %v96 = vld [vmem:[#allocation2 + $0x1a8] sm:$0xff]
    %v97 = vld [vmem:[#allocation2 + $0x1b0] sm:$0xff]
    %v98 = vld [vmem:[#allocation2 + $0x1b8] sm:$0xff]
    %v99 = vld [vmem:[#allocation2 + $0x1c0] sm:$0xff]
    %v100 = vld [vmem:[#allocation2 + $0x1c8] sm:$0xff]
    %v101 = vld [vmem:[#allocation2 + $0x1d0] sm:$0xff]
    %v102 = vld [vmem:[#allocation2 + $0x1d8] sm:$0xff]
    %v103 = vld [vmem:[#allocation2 + $0x1e0] sm:$0xff]
    %v104 = vld [vmem:[#allocation2 + $0x1e8] sm:$0xff]
    %v105 = vld [vmem:[#allocation2 + $0x1f0] sm:$0xff]
    %v106 = vld [vmem:[#allocation2 + $0x1f8] sm:$0xff]
    %v107 = vld [vmem:[#allocation2 + $0x200] sm:$0xff]
    %v108 = vld [vmem:[#allocation2 + $0x208] sm:$0xff]
    %v109 = vld [vmem:[#allocation2 + $0x210] sm:$0xff]
    %v110 = vld [vmem:[#allocation2 + $0x218] sm:$0xff]
    %v111 = vld [vmem:[#allocation2 + $0x220] sm:$0xff]
    %v112 = vld [vmem:[#allocation2 + $0x228] sm:$0xff]
    %v113 = vld [vmem:[#allocation2 + $0x230] sm:$0xff]
    %v114 = vld [vmem:[#allocation2 + $0x238] sm:$0xff]
    %v115 = vld [vmem:[#allocation2 + $0x240] sm:$0xff]
    %v116 = vld [vmem:[#allocation2 + $0x248] sm:$0xff]
    %v117 = vld [vmem:[#allocation2 + $0x250] sm:$0xff]
    %v118 = vld [vmem:[#allocation2 + $0x258] sm:$0xff]
    %v119 = vld [vmem:[#allocation2 + $0x260] sm:$0xff]
    %v120 = vld [vmem:[#allocation2 + $0x268] sm:$0xff]
    %v121 = vld [vmem:[#allocation2 + $0x270] sm:$0xff]
    %v122 = vld [vmem:[#allocation2 + $0x278] sm:$0xff]
    %v123 = vld [vmem:[#allocation2 + $0x280] sm:$0xff]
    %v124 = vld [vmem:[#allocation2 + $0x288] sm:$0xff]
    %v125 = vld [vmem:[#allocation2 + $0x290] sm:$0xff]
    %v126 = vld [vmem:[#allocation2 + $0x298] sm:$0xff]
    %v127 = vld [vmem:[#allocation2 + $0x2a0] sm:$0xff]
    %v128 = vld [vmem:[#allocation2 + $0x2a8] sm:$0xff]
    %v129 = vld [vmem:[#allocation2 + $0x2b0] sm:$0xff]
    %v130 = vld [vmem:[#allocation2 + $0x2b8] sm:$0xff]
    %v131 = vld [vmem:[#allocation2 + $0x2c0] sm:$0xff]
    %v132 = vld [vmem:[#allocation2 + $0x2c8] sm:$0xff]
    %v133 = vld [vmem:[#allocation2 + $0x2d0] sm:$0xff]
    %v134 = vld [vmem:[#allocation2 + $0x2d8] sm:$0xff]
    %v135 = vld [vmem:[#allocation2 + $0x2e0] sm:$0xff]
    %v136 = vld [vmem:[#allocation2 + $0x2e8] sm:$0xff]
    %v137 = vld [vmem:[#allocation2 + $0x2f0] sm:$0xff]
    %v138 = vld [vmem:[#allocation2 + $0x2f8] sm:$0xff]
    %v139 = vld [vmem:[#allocation2 + $0x300] sm:$0xff]
    %v140 = vld [vmem:[#allocation2 + $0x308] sm:$0xff]
    %v141 = vld [vmem:[#allocation2 + $0x310] sm:$0xff]
    %v142 = vld [vmem:[#allocation2 + $0x318] sm:$0xff]
    %v143 = vld [vmem:[#allocation2 + $0x320] sm:$0xff]
    %v144 = vld [vmem:[#allocation2 + $0x328] sm:$0xff]
    %v145 = vld [vmem:[#allocation2 + $0x330] sm:$0xff]
    %v146 = vld [vmem:[#allocation2 + $0x338] sm:$0xff]
    %v147 = vld [vmem:[#allocation2 + $0x340] sm:$0xff]
    %v148 = vld [vmem:[#allocation2 + $0x348] sm:$0xff]
    %v149 = vld [vmem:[#allocation2 + $0x350] sm:$0xff]
    %v150 = vld [vmem:[#allocation2 + $0x358] sm:$0xff]
    %v151 = vld [vmem:[#allocation2 + $0x360] sm:$0xff]
    %v152 = vld [vmem:[#allocation2 + $0x368] sm:$0xff]
    %v153 = vld [vmem:[#allocation2 + $0x370] sm:$0xff]
    %v154 = vld [vmem:[#allocation2 + $0x378] sm:$0xff]
    %v155 = vld [vmem:[#allocation2 + $0x380] sm:$0xff]
    %v156 = vld [vmem:[#allocation2 + $0x388] sm:$0xff]
    %v157 = vld [vmem:[#allocation2 + $0x390] sm:$0xff]
    %v158 = vld [vmem:[#allocation2 + $0x398] sm:$0xff]
    %v159 = vld [vmem:[#allocation2 + $0x3a0] sm:$0xff]
    %v160 = vld [vmem:[#allocation2 + $0x3a8] sm:$0xff]
    %v161 = vld [vmem:[#allocation2 + $0x3b0] sm:$0xff]
    %v162 = vld [vmem:[#allocation2 + $0x3b8] sm:$0xff]
    %v163 = vld [vmem:[#allocation2 + $0x3c0] sm:$0xff]
    %v164 = vld [vmem:[#allocation2 + $0x3c8] sm:$0xff]
    %v165 = vld [vmem:[#allocation2 + $0x3d0] sm:$0xff]
    %v166 = vld [vmem:[#allocation2 + $0x3d8] sm:$0xff]
    %v167 = vld [vmem:[#allocation2 + $0x3e0] sm:$0xff]
    %v168 = vld [vmem:[#allocation2 + $0x3e8] sm:$0xff]
    %v169 = vld [vmem:[#allocation2 + $0x3f0] sm:$0xff]
    %v170 = vld [vmem:[#allocation2 + $0x3f8] sm:$0xff]
    %v171 = vld [vmem:[#allocation2 + $0x400] sm:$0xff]
    %v172 = vld [vmem:[#allocation2 + $0x408] sm:$0xff]
    %v173 = vld [vmem:[#allocation2 + $0x410] sm:$0xff]
    %v174 = vld [vmem:[#allocation2 + $0x418] sm:$0xff]
    %v175 = vld [vmem:[#allocation2 + $0x420] sm:$0xff]
    %v176 = vld [vmem:[#allocation2 + $0x428] sm:$0xff]
    %v177 = vld [vmem:[#allocation2 + $0x430] sm:$0xff]
    %v178 = vld [vmem:[#allocation2 + $0x438] sm:$0xff]
    %v179 = vld [vmem:[#allocation2 + $0x440] sm:$0xff]
    %v180 = vld [vmem:[#allocation2 + $0x448] sm:$0xff]
    %v181 = vld [vmem:[#allocation2 + $0x450] sm:$0xff]
    %v182 = vld [vmem:[#allocation2 + $0x458] sm:$0xff]
    %v183 = vld [vmem:[#allocation2 + $0x460] sm:$0xff]
    %v184 = vld [vmem:[#allocation2 + $0x468] sm:$0xff]
    %v185 = vld [vmem:[#allocation2 + $0x470] sm:$0xff]
    %v186 = vld [vmem:[#allocation2 + $0x478] sm:$0xff]
    %v187 = vld [vmem:[#allocation2 + $0x480] sm:$0xff]
    %v188 = vld [vmem:[#allocation2 + $0x488] sm:$0xff]
    %v189 = vld [vmem:[#allocation2 + $0x490] sm:$0xff]
    %v190 = vld [vmem:[#allocation2 + $0x498] sm:$0xff]
    %v191 = vld [vmem:[#allocation2 + $0x4a0] sm:$0xff]
    %v192 = vld [vmem:[#allocation2 + $0x4a8] sm:$0xff]
    %v193 = vld [vmem:[#allocation2 + $0x4b0] sm:$0xff]
    %v194 = vld [vmem:[#allocation2 + $0x4b8] sm:$0xff]
    %v195 = vld [vmem:[#allocation2 + $0x4c0] sm:$0xff]
    %v196 = vld [vmem:[#allocation2 + $0x4c8] sm:$0xff]
    %v197 = vld [vmem:[#allocation2 + $0x4d0] sm:$0xff]
    %v198 = vld [vmem:[#allocation2 + $0x4d8] sm:$0xff]
    %v199 = vld [vmem:[#allocation2 + $0x4e0] sm:$0xff]
    %v200 = vld [vmem:[#allocation2 + $0x4e8] sm:$0xff]
    %v201 = vld [vmem:[#allocation2 + $0x4f0] sm:$0xff]
    %v202 = vld [vmem:[#allocation2 + $0x4f8] sm:$0xff]
    %v203 = vld [vmem:[#allocation2 + $0x500] sm:$0xff]
    %v204 = vld [vmem:[#allocation2 + $0x508] sm:$0xff]
    %v205 = vld [vmem:[#allocation2 + $0x510] sm:$0xff]
    %v206 = vld [vmem:[#allocation2 + $0x518] sm:$0xff]
    %v207 = vld [vmem:[#allocation2 + $0x520] sm:$0xff]
    %v208 = vld [vmem:[#allocation2 + $0x528] sm:$0xff]
    %v209 = vld [vmem:[#allocation2 + $0x530] sm:$0xff]
    %v210 = vld [vmem:[#allocation2 + $0x538] sm:$0xff]
    %v211 = vld [vmem:[#allocation2 + $0x540] sm:$0xff]
    %v212 = vld [vmem:[#allocation2 + $0x548] sm:$0xff]
    %v213 = vld [vmem:[#allocation2 + $0x550] sm:$0xff]
    %v214 = vld [vmem:[#allocation2 + $0x558] sm:$0xff]
    %v215 = vld [vmem:[#allocation2 + $0x560] sm:$0xff]
    %v216 = vld [vmem:[#allocation2 + $0x568] sm:$0xff]
    %v217 = vld [vmem:[#allocation2 + $0x570] sm:$0xff]
    %v218 = vld [vmem:[#allocation2 + $0x578] sm:$0xff]
    %v219 = vld [vmem:[#allocation2 + $0x580] sm:$0xff]
    %v220 = vld [vmem:[#allocation2 + $0x588] sm:$0xff]
    %v221 = vld [vmem:[#allocation2 + $0x590] sm:$0xff]
    %v222 = vld [vmem:[#allocation2 + $0x598] sm:$0xff]
    %v223 = vld [vmem:[#allocation2 + $0x5a0] sm:$0xff]
    %v224 = vld [vmem:[#allocation2 + $0x5a8] sm:$0xff]
    %v225 = vld [vmem:[#allocation2 + $0x5b0] sm:$0xff]
    %v226 = vld [vmem:[#allocation2 + $0x5b8] sm:$0xff]
    %v227 = vld [vmem:[#allocation2 + $0x5c0] sm:$0xff]
    %v228 = vld [vmem:[#allocation2 + $0x5c8] sm:$0xff]
    %v229 = vld [vmem:[#allocation2 + $0x5d0] sm:$0xff]
    %v230 = vld [vmem:[#allocation2 + $0x5d8] sm:$0xff]
    %v231 = vld [vmem:[#allocation2 + $0x5e0] sm:$0xff]
    %v232 = vld [vmem:[#allocation2 + $0x5e8] sm:$0xff]
    %v233 = vld [vmem:[#allocation2 + $0x5f0] sm:$0xff]
    %v234 = vld [vmem:[#allocation2 + $0x5f8] sm:$0xff]
    %v235 = vld [vmem:[#allocation2 + $0x600] sm:$0xff]
    %v236 = vld [vmem:[#allocation2 + $0x608] sm:$0xff]
    %v237 = vld [vmem:[#allocation2 + $0x610] sm:$0xff]
    %v238 = vld [vmem:[#allocation2 + $0x618] sm:$0xff]
    %v239 = vld [vmem:[#allocation2 + $0x620] sm:$0xff]
    %v240 = vld [vmem:[#allocation2 + $0x628] sm:$0xff]
    %v241 = vld [vmem:[#allocation2 + $0x630] sm:$0xff]
    %v242 = vld [vmem:[#allocation2 + $0x638] sm:$0xff]
    %v243 = vld [vmem:[#allocation2 + $0x640] sm:$0xff]
    %v244 = vld [vmem:[#allocation2 + $0x648] sm:$0xff]
    %v245 = vld [vmem:[#allocation2 + $0x650] sm:$0xff]
    %v246 = vld [vmem:[#allocation2 + $0x658] sm:$0xff]
    %v247 = vld [vmem:[#allocation2 + $0x660] sm:$0xff]
    %v248 = vld [vmem:[#allocation2 + $0x668] sm:$0xff]
    %v249 = vld [vmem:[#allocation2 + $0x670] sm:$0xff]
    %v250 = vld [vmem:[#allocation2 + $0x678] sm:$0xff]
    %v251 = vld [vmem:[#allocation2 + $0x680] sm:$0xff]
    %v252 = vld [vmem:[#allocation2 + $0x688] sm:$0xff]
    %v253 = vld [vmem:[#allocation2 + $0x690] sm:$0xff]
    %v254 = vld [vmem:[#allocation2 + $0x698] sm:$0xff]
    %v255 = vld [vmem:[#allocation2 + $0x6a0] sm:$0xff]
    %v256 = vld [vmem:[#allocation2 + $0x6a8] sm:$0xff]
    %v257 = vld [vmem:[#allocation2 + $0x6b0] sm:$0xff]
    %v258 = vld [vmem:[#allocation2 + $0x6b8] sm:$0xff]
    %v259 = vld [vmem:[#allocation2 + $0x6c0] sm:$0xff]
    %v260 = vld [vmem:[#allocation2 + $0x6c8] sm:$0xff]
    %v261 = vld [vmem:[#allocation2 + $0x6d0] sm:$0xff]
    %v262 = vld [vmem:[#allocation2 + $0x6d8] sm:$0xff]
    %v263 = vld [vmem:[#allocation2 + $0x6e0] sm:$0xff]
    %v264 = vld [vmem:[#allocation2 + $0x6e8] sm:$0xff]
    %v265 = vld [vmem:[#allocation2 + $0x6f0] sm:$0xff]
    %v266 = vld [vmem:[#allocation2 + $0x6f8] sm:$0xff]
    %v267 = vld [vmem:[#allocation2 + $0x700] sm:$0xff]
    %v268 = vld [vmem:[#allocation2 + $0x708] sm:$0xff]
    %v269 = vld [vmem:[#allocation2 + $0x710] sm:$0xff]
    %v270 = vld [vmem:[#allocation2 + $0x718] sm:$0xff]
    %v271 = vld [vmem:[#allocation2 + $0x720] sm:$0xff]
    %v272 = vld [vmem:[#allocation2 + $0x728] sm:$0xff]
    %v273 = vld [vmem:[#allocation2 + $0x730] sm:$0xff]
    %v274 = vld [vmem:[#allocation2 + $0x738] sm:$0xff]
    %v275 = vld [vmem:[#allocation2 + $0x740] sm:$0xff]
    %v276 = vld [vmem:[#allocation2 + $0x748] sm:$0xff]
    %v277 = vld [vmem:[#allocation2 + $0x750] sm:$0xff]
    %v278 = vld [vmem:[#allocation2 + $0x758] sm:$0xff]
    %v279 = vld [vmem:[#allocation2 + $0x760] sm:$0xff]
    %v280 = vld [vmem:[#allocation2 + $0x768] sm:$0xff]
    %v281 = vld [vmem:[#allocation2 + $0x770] sm:$0xff]
    %v282 = vld [vmem:[#allocation2 + $0x778] sm:$0xff]
    %v283 = vld [vmem:[#allocation2 + $0x780] sm:$0xff]
    %v284 = vld [vmem:[#allocation2 + $0x788] sm:$0xff]
    %v285 = vld [vmem:[#allocation2 + $0x790] sm:$0xff]
    %v286 = vld [vmem:[#allocation2 + $0x798] sm:$0xff]
    %v287 = vld [vmem:[#allocation2 + $0x7a0] sm:$0xff]
    %v288 = vld [vmem:[#allocation2 + $0x7a8] sm:$0xff]
    %v289 = vld [vmem:[#allocation2 + $0x7b0] sm:$0xff]
    %v290 = vld [vmem:[#allocation2 + $0x7b8] sm:$0xff]
    %v291 = vld [vmem:[#allocation2 + $0x7c0] sm:$0xff]
    %v292 = vld [vmem:[#allocation2 + $0x7c8] sm:$0xff]
    %v293 = vld [vmem:[#allocation2 + $0x7d0] sm:$0xff]
    %v294 = vld [vmem:[#allocation2 + $0x7d8] sm:$0xff]
    %v295 = vld [vmem:[#allocation2 + $0x7e0] sm:$0xff]
    %v296 = vld [vmem:[#allocation2 + $0x7e8] sm:$0xff]
    %v297 = vld [vmem:[#allocation2 + $0x7f0] sm:$0xff]
    %v298 = vld [vmem:[#allocation2 + $0x7f8] sm:$0xff]
    %v299 = vld [vmem:[#allocation5] sm:$0xff]
    %v300 = vld [vmem:[#allocation5 + $0x8] sm:$0xff]
    %v301 = vld [vmem:[#allocation5 + $0x10] sm:$0xff]
    %v302 = vld [vmem:[#allocation5 + $0x18] sm:$0xff]
    %v303 = vld [vmem:[#allocation5 + $0x20] sm:$0xff]
    %v304 = vld [vmem:[#allocation5 + $0x28] sm:$0xff]
    %v305 = vld [vmem:[#allocation5 + $0x30] sm:$0xff]
    %v306 = vld [vmem:[#allocation5 + $0x38] sm:$0xff]
    %v307 = vld [vmem:[#allocation5 + $0x40] sm:$0xff]
    %v308 = vld [vmem:[#allocation5 + $0x48] sm:$0xff]
    %v309 = vld [vmem:[#allocation5 + $0x50] sm:$0xff]
    %v310 = vld [vmem:[#allocation5 + $0x58] sm:$0xff]
    %v311 = vld [vmem:[#allocation5 + $0x60] sm:$0xff]
    %v312 = vld [vmem:[#allocation5 + $0x68] sm:$0xff]
    %v313 = vld [vmem:[#allocation5 + $0x70] sm:$0xff]
    %v314 = vld [vmem:[#allocation5 + $0x78] sm:$0xff]
    %v315 = vld [vmem:[#allocation5 + $0x80] sm:$0xff]
    %v316 = vld [vmem:[#allocation5 + $0x88] sm:$0xff]
    %v317 = vld [vmem:[#allocation5 + $0x90] sm:$0xff]
    %v318 = vld [vmem:[#allocation5 + $0x98] sm:$0xff]
    %v319 = vld [vmem:[#allocation5 + $0xa0] sm:$0xff]
    %v320 = vld [vmem:[#allocation5 + $0xa8] sm:$0xff]
    %v321 = vld [vmem:[#allocation5 + $0xb0] sm:$0xff]
    %v322 = vld [vmem:[#allocation5 + $0xb8] sm:$0xff]
    %v323 = vld [vmem:[#allocation5 + $0xc0] sm:$0xff]
    %v324 = vld [vmem:[#allocation5 + $0xc8] sm:$0xff]
    %v325 = vld [vmem:[#allocation5 + $0xd0] sm:$0xff]
    %v326 = vld [vmem:[#allocation5 + $0xd8] sm:$0xff]
    %v327 = vld [vmem:[#allocation5 + $0xe0] sm:$0xff]
    %v328 = vld [vmem:[#allocation5 + $0xe8] sm:$0xff]
    %v329 = vld [vmem:[#allocation5 + $0xf0] sm:$0xff]
    %v330 = vld [vmem:[#allocation5 + $0xf8] sm:$0xff]
    %v331 = vld [vmem:[#allocation5 + $0x100] sm:$0xff]
    %v332 = vld [vmem:[#allocation5 + $0x108] sm:$0xff]
    %v333 = vld [vmem:[#allocation5 + $0x110] sm:$0xff]
    %v334 = vld [vmem:[#allocation5 + $0x118] sm:$0xff]
    %v335 = vld [vmem:[#allocation5 + $0x120] sm:$0xff]
    %v336 = vld [vmem:[#allocation5 + $0x128] sm:$0xff]
    %v337 = vld [vmem:[#allocation5 + $0x130] sm:$0xff]
    %v338 = vld [vmem:[#allocation5 + $0x138] sm:$0xff]
    %v339 = vld [vmem:[#allocation5 + $0x140] sm:$0xff]
    %v340 = vld [vmem:[#allocation5 + $0x148] sm:$0xff]
    %v341 = vld [vmem:[#allocation5 + $0x150] sm:$0xff]
    %v342 = vld [vmem:[#allocation5 + $0x158] sm:$0xff]
    %v343 = vld [vmem:[#allocation5 + $0x160] sm:$0xff]
    %v344 = vld [vmem:[#allocation5 + $0x168] sm:$0xff]
    %v345 = vld [vmem:[#allocation5 + $0x170] sm:$0xff]
    %v346 = vld [vmem:[#allocation5 + $0x178] sm:$0xff]
    %v347 = vld [vmem:[#allocation5 + $0x180] sm:$0xff]
    %v348 = vld [vmem:[#allocation5 + $0x188] sm:$0xff]
    %v349 = vld [vmem:[#allocation5 + $0x190] sm:$0xff]
    %v350 = vld [vmem:[#allocation5 + $0x198] sm:$0xff]
    %v351 = vld [vmem:[#allocation5 + $0x1a0] sm:$0xff]
    %v352 = vld [vmem:[#allocation5 + $0x1a8] sm:$0xff]
    %v353 = vld [vmem:[#allocation5 + $0x1b0] sm:$0xff]
    %v354 = vld [vmem:[#allocation5 + $0x1b8] sm:$0xff]
    %v355 = vld [vmem:[#allocation5 + $0x1c0] sm:$0xff]
    %v356 = vld [vmem:[#allocation5 + $0x1c8] sm:$0xff]
    %v357 = vld [vmem:[#allocation5 + $0x1d0] sm:$0xff]
    %v358 = vld [vmem:[#allocation5 + $0x1d8] sm:$0xff]
    %v359 = vld [vmem:[#allocation5 + $0x1e0] sm:$0xff]
    %v360 = vld [vmem:[#allocation5 + $0x1e8] sm:$0xff]
    %v361 = vld [vmem:[#allocation5 + $0x1f0] sm:$0xff]
    %v362 = vld [vmem:[#allocation5 + $0x1f8] sm:$0xff]
    %v363 = vld [vmem:[#allocation5 + $0x200] sm:$0xff]
    %v364 = vld [vmem:[#allocation5 + $0x208] sm:$0xff]
    %v365 = vld [vmem:[#allocation5 + $0x210] sm:$0xff]
    %v366 = vld [vmem:[#allocation5 + $0x218] sm:$0xff]
    %v367 = vld [vmem:[#allocation5 + $0x220] sm:$0xff]
    %v368 = vld [vmem:[#allocation5 + $0x228] sm:$0xff]
    %v369 = vld [vmem:[#allocation5 + $0x230] sm:$0xff]
    %v370 = vld [vmem:[#allocation5 + $0x238] sm:$0xff]
    %v371 = vld [vmem:[#allocation5 + $0x240] sm:$0xff]
    %v372 = vld [vmem:[#allocation5 + $0x248] sm:$0xff]
    %v373 = vld [vmem:[#allocation5 + $0x250] sm:$0xff]
    %v374 = vld [vmem:[#allocation5 + $0x258] sm:$0xff]
    %v375 = vld [vmem:[#allocation5 + $0x260] sm:$0xff]
    %v376 = vld [vmem:[#allocation5 + $0x268] sm:$0xff]
    %v377 = vld [vmem:[#allocation5 + $0x270] sm:$0xff]
    %v378 = vld [vmem:[#allocation5 + $0x278] sm:$0xff]
    %v379 = vld [vmem:[#allocation5 + $0x280] sm:$0xff]
    %v380 = vld [vmem:[#allocation5 + $0x288] sm:$0xff]
    %v381 = vld [vmem:[#allocation5 + $0x290] sm:$0xff]
    %v382 = vld [vmem:[#allocation5 + $0x298] sm:$0xff]
    %v383 = vld [vmem:[#allocation5 + $0x2a0] sm:$0xff]
    %v384 = vld [vmem:[#allocation5 + $0x2a8] sm:$0xff]
    %v385 = vld [vmem:[#allocation5 + $0x2b0] sm:$0xff]
    %v386 = vld [vmem:[#allocation5 + $0x2b8] sm:$0xff]
    %v387 = vld [vmem:[#allocation5 + $0x2c0] sm:$0xff]
    %v388 = vld [vmem:[#allocation5 + $0x2c8] sm:$0xff]
    %v389 = vld [vmem:[#allocation5 + $0x2d0] sm:$0xff]
    %v390 = vld [vmem:[#allocation5 + $0x2d8] sm:$0xff]
    %v391 = vld [vmem:[#allocation5 + $0x2e0] sm:$0xff]
    %v392 = vld [vmem:[#allocation5 + $0x2e8] sm:$0xff]
    %v393 = vld [vmem:[#allocation5 + $0x2f0] sm:$0xff]
    %v394 = vld [vmem:[#allocation5 + $0x2f8] sm:$0xff]
    %v395 = vld [vmem:[#allocation5 + $0x300] sm:$0xff]
    %v396 = vld [vmem:[#allocation5 + $0x308] sm:$0xff]
    %v397 = vld [vmem:[#allocation5 + $0x310] sm:$0xff]
    %v398 = vld [vmem:[#allocation5 + $0x318] sm:$0xff]
    %v399 = vld [vmem:[#allocation5 + $0x320] sm:$0xff]
    %v400 = vld [vmem:[#allocation5 + $0x328] sm:$0xff]
    %v401 = vld [vmem:[#allocation5 + $0x330] sm:$0xff]
    %v402 = vld [vmem:[#allocation5 + $0x338] sm:$0xff]
    %v403 = vld [vmem:[#allocation5 + $0x340] sm:$0xff]
    %v404 = vld [vmem:[#allocation5 + $0x348] sm:$0xff]
    %v405 = vld [vmem:[#allocation5 + $0x350] sm:$0xff]
    %v406 = vld [vmem:[#allocation5 + $0x358] sm:$0xff]
    %v407 = vld [vmem:[#allocation5 + $0x360] sm:$0xff]
    %v408 = vld [vmem:[#allocation5 + $0x368] sm:$0xff]
    %v409 = vld [vmem:[#allocation5 + $0x370] sm:$0xff]
    %v410 = vld [vmem:[#allocation5 + $0x378] sm:$0xff]
    %v411 = vld [vmem:[#allocation5 + $0x380] sm:$0xff]
    %v412 = vld [vmem:[#allocation5 + $0x388] sm:$0xff]
    %v413 = vld [vmem:[#allocation5 + $0x390] sm:$0xff]
    %v414 = vld [vmem:[#allocation5 + $0x398] sm:$0xff]
    %v415 = vld [vmem:[#allocation5 + $0x3a0] sm:$0xff]
    %v416 = vld [vmem:[#allocation5 + $0x3a8] sm:$0xff]
    %v417 = vld [vmem:[#allocation5 + $0x3b0] sm:$0xff]
    %v418 = vld [vmem:[#allocation5 + $0x3b8] sm:$0xff]
    %v419 = vld [vmem:[#allocation5 + $0x3c0] sm:$0xff]
    %v420 = vld [vmem:[#allocation5 + $0x3c8] sm:$0xff]
    %v421 = vld [vmem:[#allocation5 + $0x3d0] sm:$0xff]
    %v422 = vld [vmem:[#allocation5 + $0x3d8] sm:$0xff]
    %v423 = vld [vmem:[#allocation5 + $0x3e0] sm:$0xff]
    %v424 = vld [vmem:[#allocation5 + $0x3e8] sm:$0xff]
    %v425 = vld [vmem:[#allocation5 + $0x3f0] sm:$0xff]
    %v426 = vld [vmem:[#allocation5 + $0x3f8] sm:$0xff]
    %v427 = vld [vmem:[%s2] sm:$0x1]
    %v429 = vlaneseq
    %v430 = vshrl.u32 %v429, 7
    %v431 = vsub.s32 0, %v430
    %v432 = vrot.slane %v427, %v431
    %434 = vmatprep.subr.mxu0 0.0
    %435 = vmatpush1.msra.mxu0 %v299
    %436 = vmatprep.subr.mxu0 0.0
    %437 = vmatpush1.msra.mxu0 %v300
    %438 = vmatprep.subr.mxu0 0.0
    %439 = vmatpush1.msra.mxu0 %v301
    %440 = vmatprep.subr.mxu0 0.0
    %441 = vmatpush1.msra.mxu0 %v302
    %442 = vmatprep.subr.mxu0 0.0
    %443 = vmatpush1.msra.mxu0 %v303
    %444 = vmatprep.subr.mxu0 0.0
    %445 = vmatpush1.msra.mxu0 %v304
    %446 = vmatprep.subr.mxu0 0.0
    %447 = vmatpush1.msra.mxu0 %v305
    %448 = vmatprep.subr.mxu0 0.0
    %449 = vmatpush1.msra.mxu0 %v306
    %450 = vmatprep.subr.mxu0 0.0
    %451 = vmatpush1.msra.mxu0 %v307
    %452 = vmatprep.subr.mxu0 0.0
    %453 = vmatpush1.msra.mxu0 %v308
    %454 = vmatprep.subr.mxu0 0.0
    %455 = vmatpush1.msra.mxu0 %v309
    %456 = vmatprep.subr.mxu0 0.0
    %457 = vmatpush1.msra.mxu0 %v310
    %458 = vmatprep.subr.mxu0 0.0
    %459 = vmatpush1.msra.mxu0 %v311
    %460 = vmatprep.subr.mxu0 0.0
    %461 = vmatpush1.msra.mxu0 %v312
    %462 = vmatprep.subr.mxu0 0.0
    %463 = vmatpush1.msra.mxu0 %v313
    %464 = vmatprep.subr.mxu0 0.0
    %465 = vmatpush1.msra.mxu0 %v314
    %466 = vmatprep.subr.mxu0 0.0
    %467 = vmatpush1.msra.mxu0 %v315
    %468 = vmatprep.subr.mxu0 0.0
    %469 = vmatpush1.msra.mxu0 %v316
    %470 = vmatprep.subr.mxu0 0.0
    %471 = vmatpush1.msra.mxu0 %v317
    %472 = vmatprep.subr.mxu0 0.0
    %473 = vmatpush1.msra.mxu0 %v318
    %474 = vmatprep.subr.mxu0 0.0
    %475 = vmatpush1.msra.mxu0 %v319
    %476 = vmatprep.subr.mxu0 0.0
    %477 = vmatpush1.msra.mxu0 %v320
    %478 = vmatprep.subr.mxu0 0.0
    %479 = vmatpush1.msra.mxu0 %v321
    %480 = vmatprep.subr.mxu0 0.0
    %481 = vmatpush1.msra.mxu0 %v322
    %482 = vmatprep.subr.mxu0 0.0
    %483 = vmatpush1.msra.mxu0 %v323
    %484 = vmatprep.subr.mxu0 0.0
    %485 = vmatpush1.msra.mxu0 %v324
    %486 = vmatprep.subr.mxu0 0.0
    %487 = vmatpush1.msra.mxu0 %v325
    %488 = vmatprep.subr.mxu0 0.0
    %489 = vmatpush1.msra.mxu0 %v326
    %490 = vmatprep.subr.mxu0 0.0
    %491 = vmatpush1.msra.mxu0 %v327
    %492 = vmatprep.subr.mxu0 0.0
    %493 = vmatpush1.msra.mxu0 %v328
    %494 = vmatprep.subr.mxu0 0.0
    %495 = vmatpush1.msra.mxu0 %v329
    %496 = vmatprep.subr.mxu0 0.0
    %497 = vmatpush1.msra.mxu0 %v330
    %498 = vmatprep.mubr.f32.mxu0 %v44
    %499 = vmatmul.mubr.f32.gmra.mrb[0].mxu0 %v43
    %v500 = vpop.f32.mrb[0].mxu0
    %v501 = vadd.f32 %v432, %v500
    %v502 = vpop.f32.mrb[0].mxu0
    %503 = vmatprep.mubr.f32.mxu0 %v52
    %504 = vmatmul.mubr.f32.gmra.mrb[0].mxu0 %v51
    %v505 = vpop.f32.mrb[0].mxu0
    %v506 = vadd.f32 %v432, %v505
    %v507 = vpop.f32.mrb[0].mxu0
    %508 = vmatprep.mubr.f32.mxu0 %v60
    %509 = vmatmul.mubr.f32.gmra.mrb[0].mxu0 %v59
    %v510 = vpop.f32.mrb[0].mxu0
    %v511 = vadd.f32 %v432, %v510
    %v512 = vpop.f32.mrb[0].mxu0
    %513 = vmatprep.mubr.f32.mxu0 %v68
    %514 = vmatmul.mubr.f32.gmra.mrb[0].mxu0 %v67
    %v515 = vpop.f32.mrb[0].mxu0
    %v516 = vadd.f32 %v432, %v515
    %v517 = vpop.f32.mrb[0].mxu0
    %518 = vmatprep.mubr.f32.mxu0 %v76
    %519 = vmatmul.mubr.f32.gmra.mrb[0].mxu0 %v75
    %v520 = vpop.f32.mrb[0].mxu0
    %v521 = vadd.f32 %v432, %v520
    %v522 = vpop.f32.mrb[0].mxu0
    %523 = vmatprep.mubr.f32.mxu0 %v84
    %524 = vmatmul.mubr.f32.gmra.mrb[0].mxu0 %v83
    %v525 = vpop.f32.mrb[0].mxu0
    %v526 = vadd.f32 %v432, %v525
    %v527 = vpop.f32.mrb[0].mxu0
    %528 = vmatprep.mubr.f32.mxu0 %v92
    %529 = vmatmul.mubr.f32.gmra.mrb[0].mxu0 %v91
    %v530 = vpop.f32.mrb[0].mxu0
    %v531 = vadd.f32 %v432, %v530
    %v532 = vpop.f32.mrb[0].mxu0
    %533 = vmatprep.mubr.f32.mxu0 %v100
    %534 = vmatmul.mubr.f32.gmra.mrb[0].mxu0 %v99
    %v535 = vpop.f32.mrb[0].mxu0
    %v536 = vadd.f32 %v432, %v535
    %v537 = vpop.f32.mrb[0].mxu0
    %538 = vmatprep.mubr.f32.mxu0 %v108
    %539 = vmatmul.mubr.f32.gmra.mrb[0].mxu0 %v107
    %v540 = vpop.f32.mrb[0].mxu0
    %v541 = vadd.f32 %v432, %v540
    %v542 = vpop.f32.mrb[0].mxu0
    %543 = vmatprep.mubr.f32.mxu0 %v116
    %544 = vmatmul.mubr.f32.gmra.mrb[0].mxu0 %v115
    %v545 = vpop.f32.mrb[0].mxu0
    %v546 = vadd.f32 %v432, %v545
    %v547 = vpop.f32.mrb[0].mxu0
    %548 = vmatprep.mubr.f32.mxu0 %v124
    %549 = vmatmul.mubr.f32.gmra.mrb[0].mxu0 %v123
    %v550 = vpop.f32.mrb[0].mxu0
    %v551 = vadd.f32 %v432, %v550
    %v552 = vpop.f32.mrb[0].mxu0
    %553 = vmatprep.mubr.f32.mxu0 %v132
    %554 = vmatmul.mubr.f32.gmra.mrb[0].mxu0 %v131
    %v555 = vpop.f32.mrb[0].mxu0
    %v556 = vadd.f32 %v432, %v555
    %v557 = vpop.f32.mrb[0].mxu0
    %558 = vmatprep.mubr.f32.mxu0 %v140
    %559 = vmatmul.mubr.f32.gmra.mrb[0].mxu0 %v139
    %v560 = vpop.f32.mrb[0].mxu0
    %v561 = vadd.f32 %v432, %v560
    %v562 = vpop.f32.mrb[0].mxu0
    %563 = vmatprep.mubr.f32.mxu0 %v148
    %564 = vmatmul.mubr.f32.gmra.mrb[0].mxu0 %v147
    %v565 = vpop.f32.mrb[0].mxu0
    %v566 = vadd.f32 %v432, %v565
    %v567 = vpop.f32.mrb[0].mxu0
    %568 = vmatprep.mubr.f32.mxu0 %v156
    %569 = vmatmul.mubr.f32.gmra.mrb[0].mxu0 %v155
    %v570 = vpop.f32.mrb[0].mxu0
    %v571 = vadd.f32 %v432, %v570
    %v572 = vpop.f32.mrb[0].mxu0
    %573 = vmatprep.mubr.f32.mxu0 %v164
    %574 = vmatmul.mubr.f32.gmra.mrb[0].mxu0 %v163
    %v575 = vpop.f32.mrb[0].mxu0
    %v576 = vadd.f32 %v432, %v575
    %v577 = vpop.f32.mrb[0].mxu0
    %578 = vmatprep.mubr.f32.mxu0 %v172
    %579 = vmatmul.mubr.f32.gmra.mrb[0].mxu0 %v171
    %v580 = vpop.f32.mrb[0].mxu0
    %v581 = vadd.f32 %v432, %v580
    %v582 = vpop.f32.mrb[0].mxu0
    %583 = vmatprep.mubr.f32.mxu0 %v180
    %584 = vmatmul.mubr.f32.gmra.mrb[0].mxu0 %v179
    %v585 = vpop.f32.mrb[0].mxu0
    %v586 = vadd.f32 %v432, %v585
    %v587 = vpop.f32.mrb[0].mxu0
    %588 = vmatprep.mubr.f32.mxu0 %v188
    %589 = vmatmul.mubr.f32.gmra.mrb[0].mxu0 %v187
    %v590 = vpop.f32.mrb[0].mxu0
    %v591 = vadd.f32 %v432, %v590
    %v592 = vpop.f32.mrb[0].mxu0
    %593 = vmatprep.mubr.f32.mxu0 %v196
    %594 = vmatmul.mubr.f32.gmra.mrb[0].mxu0 %v195
    %v595 = vpop.f32.mrb[0].mxu0
    %v596 = vadd.f32 %v432, %v595
    %v597 = vpop.f32.mrb[0].mxu0
    %598 = vmatprep.mubr.f32.mxu0 %v204
    %599 = vmatmul.mubr.f32.gmra.mrb[0].mxu0 %v203
    %v600 = vpop.f32.mrb[0].mxu0
    %v601 = vadd.f32 %v432, %v600
    %v602 = vpop.f32.mrb[0].mxu0
    %603 = vmatprep.mubr.f32.mxu0 %v212
    %604 = vmatmul.mubr.f32.gmra.mrb[0].mxu0 %v211
    %v605 = vpop.f32.mrb[0].mxu0
    %v606 = vadd.f32 %v432, %v605
    %v607 = vpop.f32.mrb[0].mxu0
    %608 = vmatprep.mubr.f32.mxu0 %v220
    %609 = vmatmul.mubr.f32.gmra.mrb[0].mxu0 %v219
    %v610 = vpop.f32.mrb[0].mxu0
    %v611 = vadd.f32 %v432, %v610
    %v612 = vpop.f32.mrb[0].mxu0
    %613 = vmatprep.mubr.f32.mxu0 %v228
    %614 = vmatmul.mubr.f32.gmra.mrb[0].mxu0 %v227
    %v615 = vpop.f32.mrb[0].mxu0
    %v616 = vadd.f32 %v432, %v615
    %v617 = vpop.f32.mrb[0].mxu0
    %618 = vmatprep.mubr.f32.mxu0 %v236
    %619 = vmatmul.mubr.f32.gmra.mrb[0].mxu0 %v235
    %v620 = vpop.f32.mrb[0].mxu0
    %v621 = vadd.f32 %v432, %v620
    %v622 = vpop.f32.mrb[0].mxu0
    %623 = vmatprep.mubr.f32.mxu0 %v244
    %624 = vmatmul.mubr.f32.gmra.mrb[0].mxu0 %v243
    %v625 = vpop.f32.mrb[0].mxu0
    %v626 = vadd.f32 %v432, %v625
    %v627 = vpop.f32.mrb[0].mxu0
    %628 = vmatprep.mubr.f32.mxu0 %v252
    %629 = vmatmul.mubr.f32.gmra.mrb[0].mxu0 %v251
    %v630 = vpop.f32.mrb[0].mxu0
    %v631 = vadd.f32 %v432, %v630
    %v632 = vpop.f32.mrb[0].mxu0
    %633 = vmatprep.mubr.f32.mxu0 %v260
    %634 = vmatmul.mubr.f32.gmra.mrb[0].mxu0 %v259
    %v635 = vpop.f32.mrb[0].mxu0
    %v636 = vadd.f32 %v432, %v635
    %v637 = vpop.f32.mrb[0].mxu0
    %638 = vmatprep.mubr.f32.mxu0 %v268
    %639 = vmatmul.mubr.f32.gmra.mrb[0].mxu0 %v267
    %v640 = vpop.f32.mrb[0].mxu0
    %v641 = vadd.f32 %v432, %v640
    %v642 = vpop.f32.mrb[0].mxu0
    %643 = vmatprep.mubr.f32.mxu0 %v276
    %644 = vmatmul.mubr.f32.gmra.mrb[0].mxu0 %v275
    %v645 = vpop.f32.mrb[0].mxu0
    %v646 = vadd.f32 %v432, %v645
    %v647 = vpop.f32.mrb[0].mxu0
    %648 = vmatprep.mubr.f32.mxu0 %v284
    %649 = vmatmul.mubr.f32.gmra.mrb[0].mxu0 %v283
    %v650 = vpop.f32.mrb[0].mxu0
    %v651 = vadd.f32 %v432, %v650
    %v652 = vpop.f32.mrb[0].mxu0
    %653 = vmatprep.mubr.f32.mxu0 %v292
    %654 = vmatmul.mubr.f32.gmra.mrb[0].mxu0 %v291
    %v655 = vpop.f32.mrb[0].mxu0
    %v656 = vadd.f32 %v432, %v655
    %v657 = vpop.f32.mrb[0].mxu0
    %658 = vdwg.mxu0
    %659 = vmatprep.subr.mxu0 0.0
    %660 = vmatpush1.msra.mxu0 %v331
    %661 = vmatprep.subr.mxu0 0.0
    %662 = vmatpush1.msra.mxu0 %v332
    %663 = vmatprep.subr.mxu0 0.0
    %664 = vmatpush1.msra.mxu0 %v333
    %665 = vmatprep.subr.mxu0 0.0
    %666 = vmatpush1.msra.mxu0 %v334
    %667 = vmatprep.subr.mxu0 0.0
    %668 = vmatpush1.msra.mxu0 %v335
    %669 = vmatprep.subr.mxu0 0.0
    %670 = vmatpush1.msra.mxu0 %v336
    %671 = vmatprep.subr.mxu0 0.0
    %672 = vmatpush1.msra.mxu0 %v337
    %673 = vmatprep.subr.mxu0 0.0
    %674 = vmatpush1.msra.mxu0 %v338
    %675 = vmatprep.subr.mxu0 0.0
    %676 = vmatpush1.msra.mxu0 %v339
    %677 = vmatprep.subr.mxu0 0.0
    %678 = vmatpush1.msra.mxu0 %v340
    %679 = vmatprep.subr.mxu0 0.0
    %680 = vmatpush1.msra.mxu0 %v341
    %681 = vmatprep.subr.mxu0 0.0
    %682 = vmatpush1.msra.mxu0 %v342
    %683 = vmatprep.subr.mxu0 0.0
    %684 = vmatpush1.msra.mxu0 %v343
    %685 = vmatprep.subr.mxu0 0.0
    %686 = vmatpush1.msra.mxu0 %v344
    %687 = vmatprep.subr.mxu0 0.0
    %688 = vmatpush1.msra.mxu0 %v345
    %689 = vmatprep.subr.mxu0 0.0
    %690 = vmatpush1.msra.mxu0 %v346
    %691 = vmatprep.subr.mxu0 0.0
    %692 = vmatpush1.msra.mxu0 %v347
    %693 = vmatprep.subr.mxu0 0.0
    %694 = vmatpush1.msra.mxu0 %v348
    %695 = vmatprep.subr.mxu0 0.0
    %696 = vmatpush1.msra.mxu0 %v349
    %697 = vmatprep.subr.mxu0 0.0
    %698 = vmatpush1.msra.mxu0 %v350
    %699 = vmatprep.subr.mxu0 0.0
    %700 = vmatpush1.msra.mxu0 %v351
    %701 = vmatprep.subr.mxu0 0.0
    %702 = vmatpush1.msra.mxu0 %v352
    %703 = vmatprep.subr.mxu0 0.0
    %704 = vmatpush1.msra.mxu0 %v353
    %705 = vmatprep.subr.mxu0 0.0
    %706 = vmatpush1.msra.mxu0 %v354
    %707 = vmatprep.subr.mxu0 0.0
    %708 = vmatpush1.msra.mxu0 %v355
    %709 = vmatprep.subr.mxu0 0.0
    %710 = vmatpush1.msra.mxu0 %v356
    %711 = vmatprep.subr.mxu0 0.0
    %712 = vmatpush1.msra.mxu0 %v357
    %713 = vmatprep.subr.mxu0 0.0
    %714 = vmatpush1.msra.mxu0 %v358
    %715 = vmatprep.subr.mxu0 0.0
    %716 = vmatpush1.msra.mxu0 %v359
    %717 = vmatprep.subr.mxu0 0.0
    %718 = vmatpush1.msra.mxu0 %v360
    %719 = vmatprep.subr.mxu0 0.0
    %720 = vmatpush1.msra.mxu0 %v361
    %721 = vmatprep.subr.mxu0 0.0
    %722 = vmatpush1.msra.mxu0 %v362
    %723 = vmatprep.mubr.f32.mxu0 %v46
    %724 = vmatmul.mubr.f32.gmra.mrb[0].mxu0 %v45
    %v725 = vpop.f32.mrb[0].mxu0
    %v726 = vadd.f32 %v501, %v725
    %v727 = vpop.f32.mrb[0].mxu0
    %728 = vmatprep.mubr.f32.mxu0 %v54
    %729 = vmatmul.mubr.f32.gmra.mrb[0].mxu0 %v53
    %v730 = vpop.f32.mrb[0].mxu0
    %v731 = vadd.f32 %v506, %v730
    %v732 = vpop.f32.mrb[0].mxu0
    %733 = vmatprep.mubr.f32.mxu0 %v62
    %734 = vmatmul.mubr.f32.gmra.mrb[0].mxu0 %v61
    %v735 = vpop.f32.mrb[0].mxu0
    %v736 = vadd.f32 %v511, %v735
    %v737 = vpop.f32.mrb[0].mxu0
    %738 = vmatprep.mubr.f32.mxu0 %v70
    %739 = vmatmul.mubr.f32.gmra.mrb[0].mxu0 %v69
    %v740 = vpop.f32.mrb[0].mxu0
    %v741 = vadd.f32 %v516, %v740
    %v742 = vpop.f32.mrb[0].mxu0
    %743 = vmatprep.mubr.f32.mxu0 %v78
    %744 = vmatmul.mubr.f32.gmra.mrb[0].mxu0 %v77
    %v745 = vpop.f32.mrb[0].mxu0
    %v746 = vadd.f32 %v521, %v745
    %v747 = vpop.f32.mrb[0].mxu0
    %748 = vmatprep.mubr.f32.mxu0 %v86
    %749 = vmatmul.mubr.f32.gmra.mrb[0].mxu0 %v85
    %v750 = vpop.f32.mrb[0].mxu0
    %v751 = vadd.f32 %v526, %v750
    %v752 = vpop.f32.mrb[0].mxu0
    %753 = vmatprep.mubr.f32.mxu0 %v94
    %754 = vmatmul.mubr.f32.gmra.mrb[0].mxu0 %v93
    %v755 = vpop.f32.mrb[0].mxu0
    %v756 = vadd.f32 %v531, %v755
    %v757 = vpop.f32.mrb[0].mxu0
    %758 = vmatprep.mubr.f32.mxu0 %v102
    %759 = vmatmul.mubr.f32.gmra.mrb[0].mxu0 %v101
    %v760 = vpop.f32.mrb[0].mxu0
    %v761 = vadd.f32 %v536, %v760
    %v762 = vpop.f32.mrb[0].mxu0
    %763 = vmatprep.mubr.f32.mxu0 %v110
    %764 = vmatmul.mubr.f32.gmra.mrb[0].mxu0 %v109
    %v765 = vpop.f32.mrb[0].mxu0
    %v766 = vadd.f32 %v541, %v765
    %v767 = vpop.f32.mrb[0].mxu0
    %768 = vmatprep.mubr.f32.mxu0 %v118
    %769 = vmatmul.mubr.f32.gmra.mrb[0].mxu0 %v117
    %v770 = vpop.f32.mrb[0].mxu0
    %v771 = vadd.f32 %v546, %v770
    %v772 = vpop.f32.mrb[0].mxu0
    %773 = vmatprep.mubr.f32.mxu0 %v126
    %774 = vmatmul.mubr.f32.gmra.mrb[0].mxu0 %v125
    %v775 = vpop.f32.mrb[0].mxu0
    %v776 = vadd.f32 %v551, %v775
    %v777 = vpop.f32.mrb[0].mxu0
    %778 = vmatprep.mubr.f32.mxu0 %v134
    %779 = vmatmul.mubr.f32.gmra.mrb[0].mxu0 %v133
    %v780 = vpop.f32.mrb[0].mxu0
    %v781 = vadd.f32 %v556, %v780
    %v782 = vpop.f32.mrb[0].mxu0
    %783 = vmatprep.mubr.f32.mxu0 %v142
    %784 = vmatmul.mubr.f32.gmra.mrb[0].mxu0 %v141
    %v785 = vpop.f32.mrb[0].mxu0
    %v786 = vadd.f32 %v561, %v785
    %v787 = vpop.f32.mrb[0].mxu0
    %788 = vmatprep.mubr.f32.mxu0 %v150
    %789 = vmatmul.mubr.f32.gmra.mrb[0].mxu0 %v149
    %v790 = vpop.f32.mrb[0].mxu0
    %v791 = vadd.f32 %v566, %v790
    %v792 = vpop.f32.mrb[0].mxu0
    %793 = vmatprep.mubr.f32.mxu0 %v158
    %794 = vmatmul.mubr.f32.gmra.mrb[0].mxu0 %v157
    %v795 = vpop.f32.mrb[0].mxu0
    %v796 = vadd.f32 %v571, %v795
    %v797 = vpop.f32.mrb[0].mxu0
    %798 = vmatprep.mubr.f32.mxu0 %v166
    %799 = vmatmul.mubr.f32.gmra.mrb[0].mxu0 %v165
    %v800 = vpop.f32.mrb[0].mxu0
    %v801 = vadd.f32 %v576, %v800
    %v802 = vpop.f32.mrb[0].mxu0
    %803 = vmatprep.mubr.f32.mxu0 %v174
    %804 = vmatmul.mubr.f32.gmra.mrb[0].mxu0 %v173
    %v805 = vpop.f32.mrb[0].mxu0
    %v806 = vadd.f32 %v581, %v805
    %v807 = vpop.f32.mrb[0].mxu0
    %808 = vmatprep.mubr.f32.mxu0 %v182
    %809 = vmatmul.mubr.f32.gmra.mrb[0].mxu0 %v181
    %v810 = vpop.f32.mrb[0].mxu0
    %v811 = vadd.f32 %v586, %v810
    %v812 = vpop.f32.mrb[0].mxu0
    %813 = vmatprep.mubr.f32.mxu0 %v190
    %814 = vmatmul.mubr.f32.gmra.mrb[0].mxu0 %v189
    %v815 = vpop.f32.mrb[0].mxu0
    %v816 = vadd.f32 %v591, %v815
    %v817 = vpop.f32.mrb[0].mxu0
    %818 = vmatprep.mubr.f32.mxu0 %v198
    %819 = vmatmul.mubr.f32.gmra.mrb[0].mxu0 %v197
    %v820 = vpop.f32.mrb[0].mxu0
    %v821 = vadd.f32 %v596, %v820
    %v822 = vpop.f32.mrb[0].mxu0
    %823 = vmatprep.mubr.f32.mxu0 %v206
    %824 = vmatmul.mubr.f32.gmra.mrb[0].mxu0 %v205
    %v825 = vpop.f32.mrb[0].mxu0
    %v826 = vadd.f32 %v601, %v825
    %v827 = vpop.f32.mrb[0].mxu0
    %828 = vmatprep.mubr.f32.mxu0 %v214
    %829 = vmatmul.mubr.f32.gmra.mrb[0].mxu0 %v213
    %v830 = vpop.f32.mrb[0].mxu0
    %v831 = vadd.f32 %v606, %v830
    %v832 = vpop.f32.mrb[0].mxu0
    %833 = vmatprep.mubr.f32.mxu0 %v222
    %834 = vmatmul.mubr.f32.gmra.mrb[0].mxu0 %v221
    %v835 = vpop.f32.mrb[0].mxu0
    %v836 = vadd.f32 %v611, %v835
    %v837 = vpop.f32.mrb[0].mxu0
    %838 = vmatprep.mubr.f32.mxu0 %v230
    %839 = vmatmul.mubr.f32.gmra.mrb[0].mxu0 %v229
    %v840 = vpop.f32.mrb[0].mxu0
    %v841 = vadd.f32 %v616, %v840
    %v842 = vpop.f32.mrb[0].mxu0
    %843 = vmatprep.mubr.f32.mxu0 %v238
    %844 = vmatmul.mubr.f32.gmra.mrb[0].mxu0 %v237
    %v845 = vpop.f32.mrb[0].mxu0
    %v846 = vadd.f32 %v621, %v845
    %v847 = vpop.f32.mrb[0].mxu0
    %848 = vmatprep.mubr.f32.mxu0 %v246
    %849 = vmatmul.mubr.f32.gmra.mrb[0].mxu0 %v245
    %v850 = vpop.f32.mrb[0].mxu0
    %v851 = vadd.f32 %v626, %v850
    %v852 = vpop.f32.mrb[0].mxu0
    %853 = vmatprep.mubr.f32.mxu0 %v254
    %854 = vmatmul.mubr.f32.gmra.mrb[0].mxu0 %v253
    %v855 = vpop.f32.mrb[0].mxu0
    %v856 = vadd.f32 %v631, %v855
    %v857 = vpop.f32.mrb[0].mxu0
    %858 = vmatprep.mubr.f32.mxu0 %v262
    %859 = vmatmul.mubr.f32.gmra.mrb[0].mxu0 %v261
    %v860 = vpop.f32.mrb[0].mxu0
    %v861 = vadd.f32 %v636, %v860
    %v862 = vpop.f32.mrb[0].mxu0
    %863 = vmatprep.mubr.f32.mxu0 %v270
    %864 = vmatmul.mubr.f32.gmra.mrb[0].mxu0 %v269
    %v865 = vpop.f32.mrb[0].mxu0
    %v866 = vadd.f32 %v641, %v865
    %v867 = vpop.f32.mrb[0].mxu0
    %868 = vmatprep.mubr.f32.mxu0 %v278
    %869 = vmatmul.mubr.f32.gmra.mrb[0].mxu0 %v277
    %v870 = vpop.f32.mrb[0].mxu0
    %v871 = vadd.f32 %v646, %v870
    %v872 = vpop.f32.mrb[0].mxu0
    %873 = vmatprep.mubr.f32.mxu0 %v286
    %874 = vmatmul.mubr.f32.gmra.mrb[0].mxu0 %v285
    %v875 = vpop.f32.mrb[0].mxu0
    %v876 = vadd.f32 %v651, %v875
    %v877 = vpop.f32.mrb[0].mxu0
    %878 = vmatprep.mubr.f32.mxu0 %v294
    %879 = vmatmul.mubr.f32.gmra.mrb[0].mxu0 %v293
    %v880 = vpop.f32.mrb[0].mxu0
    %v881 = vadd.f32 %v656, %v880
    %v882 = vpop.f32.mrb[0].mxu0
    %883 = vdwg.mxu0
    %884 = vmatprep.subr.mxu0 0.0
    %885 = vmatpush1.msra.mxu0 %v363
    %886 = vmatprep.subr.mxu0 0.0
    %887 = vmatpush1.msra.mxu0 %v364
    %888 = vmatprep.subr.mxu0 0.0
    %889 = vmatpush1.msra.mxu0 %v365
    %890 = vmatprep.subr.mxu0 0.0
    %891 = vmatpush1.msra.mxu0 %v366
    %892 = vmatprep.subr.mxu0 0.0
    %893 = vmatpush1.msra.mxu0 %v367
    %894 = vmatprep.subr.mxu0 0.0
    %895 = vmatpush1.msra.mxu0 %v368
    %896 = vmatprep.subr.mxu0 0.0
    %897 = vmatpush1.msra.mxu0 %v369
    %898 = vmatprep.subr.mxu0 0.0
    %899 = vmatpush1.msra.mxu0 %v370
    %900 = vmatprep.subr.mxu0 0.0
    %901 = vmatpush1.msra.mxu0 %v371
    %902 = vmatprep.subr.mxu0 0.0
    %903 = vmatpush1.msra.mxu0 %v372
    %904 = vmatprep.subr.mxu0 0.0
    %905 = vmatpush1.msra.mxu0 %v373
    %906 = vmatprep.subr.mxu0 0.0
    %907 = vmatpush1.msra.mxu0 %v374
    %908 = vmatprep.subr.mxu0 0.0
    %909 = vmatpush1.msra.mxu0 %v375
    %910 = vmatprep.subr.mxu0 0.0
    %911 = vmatpush1.msra.mxu0 %v376
    %912 = vmatprep.subr.mxu0 0.0
    %913 = vmatpush1.msra.mxu0 %v377
    %914 = vmatprep.subr.mxu0 0.0
    %915 = vmatpush1.msra.mxu0 %v378
    %916 = vmatprep.subr.mxu0 0.0
    %917 = vmatpush1.msra.mxu0 %v379
    %918 = vmatprep.subr.mxu0 0.0
    %919 = vmatpush1.msra.mxu0 %v380
    %920 = vmatprep.subr.mxu0 0.0
    %921 = vmatpush1.msra.mxu0 %v381
    %922 = vmatprep.subr.mxu0 0.0
    %923 = vmatpush1.msra.mxu0 %v382
    %924 = vmatprep.subr.mxu0 0.0
    %925 = vmatpush1.msra.mxu0 %v383
    %926 = vmatprep.subr.mxu0 0.0
    %927 = vmatpush1.msra.mxu0 %v384
    %928 = vmatprep.subr.mxu0 0.0
    %929 = vmatpush1.msra.mxu0 %v385
    %930 = vmatprep.subr.mxu0 0.0
    %931 = vmatpush1.msra.mxu0 %v386
    %932 = vmatprep.subr.mxu0 0.0
    %933 = vmatpush1.msra.mxu0 %v387
    %934 = vmatprep.subr.mxu0 0.0
    %935 = vmatpush1.msra.mxu0 %v388
    %936 = vmatprep.subr.mxu0 0.0
    %937 = vmatpush1.msra.mxu0 %v389
    %938 = vmatprep.subr.mxu0 0.0
    %939 = vmatpush1.msra.mxu0 %v390
    %940 = vmatprep.subr.mxu0 0.0
    %941 = vmatpush1.msra.mxu0 %v391
    %942 = vmatprep.subr.mxu0 0.0
    %943 = vmatpush1.msra.mxu0 %v392
    %944 = vmatprep.subr.mxu0 0.0
    %945 = vmatpush1.msra.mxu0 %v393
    %946 = vmatprep.subr.mxu0 0.0
    %947 = vmatpush1.msra.mxu0 %v394
    %948 = vmatprep.mubr.f32.mxu0 %v48
    %949 = vmatmul.mubr.f32.gmra.mrb[0].mxu0 %v47
    %v950 = vpop.f32.mrb[0].mxu0
    %v951 = vadd.f32 %v726, %v950
    %v952 = vpop.f32.mrb[0].mxu0
    %953 = vmatprep.mubr.f32.mxu0 %v56
    %954 = vmatmul.mubr.f32.gmra.mrb[0].mxu0 %v55
    %v955 = vpop.f32.mrb[0].mxu0
    %v956 = vadd.f32 %v731, %v955
    %v957 = vpop.f32.mrb[0].mxu0
    %958 = vmatprep.mubr.f32.mxu0 %v64
    %959 = vmatmul.mubr.f32.gmra.mrb[0].mxu0 %v63
    %v960 = vpop.f32.mrb[0].mxu0
    %v961 = vadd.f32 %v736, %v960
    %v962 = vpop.f32.mrb[0].mxu0
    %963 = vmatprep.mubr.f32.mxu0 %v72
    %964 = vmatmul.mubr.f32.gmra.mrb[0].mxu0 %v71
    %v965 = vpop.f32.mrb[0].mxu0
    %v966 = vadd.f32 %v741, %v965
    %v967 = vpop.f32.mrb[0].mxu0
    %968 = vmatprep.mubr.f32.mxu0 %v80
    %969 = vmatmul.mubr.f32.gmra.mrb[0].mxu0 %v79
    %v970 = vpop.f32.mrb[0].mxu0
    %v971 = vadd.f32 %v746, %v970
    %v972 = vpop.f32.mrb[0].mxu0
    %973 = vmatprep.mubr.f32.mxu0 %v88
    %974 = vmatmul.mubr.f32.gmra.mrb[0].mxu0 %v87
    %v975 = vpop.f32.mrb[0].mxu0
    %v976 = vadd.f32 %v751, %v975
    %v977 = vpop.f32.mrb[0].mxu0
    %978 = vmatprep.mubr.f32.mxu0 %v96
    %979 = vmatmul.mubr.f32.gmra.mrb[0].mxu0 %v95
    %v980 = vpop.f32.mrb[0].mxu0
    %v981 = vadd.f32 %v756, %v980
    %v982 = vpop.f32.mrb[0].mxu0
    %983 = vmatprep.mubr.f32.mxu0 %v104
    %984 = vmatmul.mubr.f32.gmra.mrb[0].mxu0 %v103
    %v985 = vpop.f32.mrb[0].mxu0
    %v986 = vadd.f32 %v761, %v985
    %v987 = vpop.f32.mrb[0].mxu0
    %988 = vmatprep.mubr.f32.mxu0 %v112
    %989 = vmatmul.mubr.f32.gmra.mrb[0].mxu0 %v111
    %v990 = vpop.f32.mrb[0].mxu0
    %v991 = vadd.f32 %v766, %v990
    %v992 = vpop.f32.mrb[0].mxu0
    %993 = vmatprep.mubr.f32.mxu0 %v120
    %994 = vmatmul.mubr.f32.gmra.mrb[0].mxu0 %v119
    %v995 = vpop.f32.mrb[0].mxu0
    %v996 = vadd.f32 %v771, %v995
    %v997 = vpop.f32.mrb[0].mxu0
    %998 = vmatprep.mubr.f32.mxu0 %v128
    %999 = vmatmul.mubr.f32.gmra.mrb[0].mxu0 %v127
    %v1000 = vpop.f32.mrb[0].mxu0
    %v1001 = vadd.f32 %v776, %v1000
    %v1002 = vpop.f32.mrb[0].mxu0
    %1003 = vmatprep.mubr.f32.mxu0 %v136
    %1004 = vmatmul.mubr.f32.gmra.mrb[0].mxu0 %v135
    %v1005 = vpop.f32.mrb[0].mxu0
    %v1006 = vadd.f32 %v781, %v1005
    %v1007 = vpop.f32.mrb[0].mxu0
    %1008 = vmatprep.mubr.f32.mxu0 %v144
    %1009 = vmatmul.mubr.f32.gmra.mrb[0].mxu0 %v143
    %v1010 = vpop.f32.mrb[0].mxu0
    %v1011 = vadd.f32 %v786, %v1010
    %v1012 = vpop.f32.mrb[0].mxu0
    %1013 = vmatprep.mubr.f32.mxu0 %v152
    %1014 = vmatmul.mubr.f32.gmra.mrb[0].mxu0 %v151
    %v1015 = vpop.f32.mrb[0].mxu0
    %v1016 = vadd.f32 %v791, %v1015
    %v1017 = vpop.f32.mrb[0].mxu0
    %1018 = vmatprep.mubr.f32.mxu0 %v160
    %1019 = vmatmul.mubr.f32.gmra.mrb[0].mxu0 %v159
    %v1020 = vpop.f32.mrb[0].mxu0
    %v1021 = vadd.f32 %v796, %v1020
    %v1022 = vpop.f32.mrb[0].mxu0
    %1023 = vmatprep.mubr.f32.mxu0 %v168
    %1024 = vmatmul.mubr.f32.gmra.mrb[0].mxu0 %v167
    %v1025 = vpop.f32.mrb[0].mxu0
    %v1026 = vadd.f32 %v801, %v1025
    %v1027 = vpop.f32.mrb[0].mxu0
    %1028 = vmatprep.mubr.f32.mxu0 %v176
    %1029 = vmatmul.mubr.f32.gmra.mrb[0].mxu0 %v175
    %v1030 = vpop.f32.mrb[0].mxu0
    %v1031 = vadd.f32 %v806, %v1030
    %v1032 = vpop.f32.mrb[0].mxu0
    %1033 = vmatprep.mubr.f32.mxu0 %v184
    %1034 = vmatmul.mubr.f32.gmra.mrb[0].mxu0 %v183
    %v1035 = vpop.f32.mrb[0].mxu0
    %v1036 = vadd.f32 %v811, %v1035
    %v1037 = vpop.f32.mrb[0].mxu0
    %1038 = vmatprep.mubr.f32.mxu0 %v192
    %1039 = vmatmul.mubr.f32.gmra.mrb[0].mxu0 %v191
    %v1040 = vpop.f32.mrb[0].mxu0
    %v1041 = vadd.f32 %v816, %v1040
    %v1042 = vpop.f32.mrb[0].mxu0
    %1043 = vmatprep.mubr.f32.mxu0 %v200
    %1044 = vmatmul.mubr.f32.gmra.mrb[0].mxu0 %v199
    %v1045 = vpop.f32.mrb[0].mxu0
    %v1046 = vadd.f32 %v821, %v1045
    %v1047 = vpop.f32.mrb[0].mxu0
    %1048 = vmatprep.mubr.f32.mxu0 %v208
    %1049 = vmatmul.mubr.f32.gmra.mrb[0].mxu0 %v207
    %v1050 = vpop.f32.mrb[0].mxu0
    %v1051 = vadd.f32 %v826, %v1050
    %v1052 = vpop.f32.mrb[0].mxu0
    %1053 = vmatprep.mubr.f32.mxu0 %v216
    %1054 = vmatmul.mubr.f32.gmra.mrb[0].mxu0 %v215
    %v1055 = vpop.f32.mrb[0].mxu0
    %v1056 = vadd.f32 %v831, %v1055
    %v1057 = vpop.f32.mrb[0].mxu0
    %1058 = vmatprep.mubr.f32.mxu0 %v224
    %1059 = vmatmul.mubr.f32.gmra.mrb[0].mxu0 %v223
    %v1060 = vpop.f32.mrb[0].mxu0
    %v1061 = vadd.f32 %v836, %v1060
    %v1062 = vpop.f32.mrb[0].mxu0
    %1063 = vmatprep.mubr.f32.mxu0 %v232
    %1064 = vmatmul.mubr.f32.gmra.mrb[0].mxu0 %v231
    %v1065 = vpop.f32.mrb[0].mxu0
    %v1066 = vadd.f32 %v841, %v1065
    %v1067 = vpop.f32.mrb[0].mxu0
    %1068 = vmatprep.mubr.f32.mxu0 %v240
    %1069 = vmatmul.mubr.f32.gmra.mrb[0].mxu0 %v239
    %v1070 = vpop.f32.mrb[0].mxu0
    %v1071 = vadd.f32 %v846, %v1070
    %v1072 = vpop.f32.mrb[0].mxu0
    %1073 = vmatprep.mubr.f32.mxu0 %v248
    %1074 = vmatmul.mubr.f32.gmra.mrb[0].mxu0 %v247
    %v1075 = vpop.f32.mrb[0].mxu0
    %v1076 = vadd.f32 %v851, %v1075
    %v1077 = vpop.f32.mrb[0].mxu0
    %1078 = vmatprep.mubr.f32.mxu0 %v256
    %1079 = vmatmul.mubr.f32.gmra.mrb[0].mxu0 %v255
    %v1080 = vpop.f32.mrb[0].mxu0
    %v1081 = vadd.f32 %v856, %v1080
    %v1082 = vpop.f32.mrb[0].mxu0
    %1083 = vmatprep.mubr.f32.mxu0 %v264
    %1084 = vmatmul.mubr.f32.gmra.mrb[0].mxu0 %v263
    %v1085 = vpop.f32.mrb[0].mxu0
    %v1086 = vadd.f32 %v861, %v1085
    %v1087 = vpop.f32.mrb[0].mxu0
    %1088 = vmatprep.mubr.f32.mxu0 %v272
    %1089 = vmatmul.mubr.f32.gmra.mrb[0].mxu0 %v271
    %v1090 = vpop.f32.mrb[0].mxu0
    %v1091 = vadd.f32 %v866, %v1090
    %v1092 = vpop.f32.mrb[0].mxu0
    %1093 = vmatprep.mubr.f32.mxu0 %v280
    %1094 = vmatmul.mubr.f32.gmra.mrb[0].mxu0 %v279
    %v1095 = vpop.f32.mrb[0].mxu0
    %v1096 = vadd.f32 %v871, %v1095
    %v1097 = vpop.f32.mrb[0].mxu0
    %1098 = vmatprep.mubr.f32.mxu0 %v288
    %1099 = vmatmul.mubr.f32.gmra.mrb[0].mxu0 %v287
    %v1100 = vpop.f32.mrb[0].mxu0
    %v1101 = vadd.f32 %v876, %v1100
    %v1102 = vpop.f32.mrb[0].mxu0
    %1103 = vmatprep.mubr.f32.mxu0 %v296
    %1104 = vmatmul.mubr.f32.gmra.mrb[0].mxu0 %v295
    %v1105 = vpop.f32.mrb[0].mxu0
    %v1106 = vadd.f32 %v881, %v1105
    %v1107 = vpop.f32.mrb[0].mxu0
    %1108 = vdwg.mxu0
    %1109 = vmatprep.subr.mxu0 0.0
    %1110 = vmatpush1.msra.mxu0 %v395
    %1111 = vmatprep.subr.mxu0 0.0
    %1112 = vmatpush1.msra.mxu0 %v396
    %1113 = vmatprep.subr.mxu0 0.0
    %1114 = vmatpush1.msra.mxu0 %v397
    %1115 = vmatprep.subr.mxu0 0.0
    %1116 = vmatpush1.msra.mxu0 %v398
    %1117 = vmatprep.subr.mxu0 0.0
    %1118 = vmatpush1.msra.mxu0 %v399
    %1119 = vmatprep.subr.mxu0 0.0
    %1120 = vmatpush1.msra.mxu0 %v400
    %1121 = vmatprep.subr.mxu0 0.0
    %1122 = vmatpush1.msra.mxu0 %v401
    %1123 = vmatprep.subr.mxu0 0.0
    %1124 = vmatpush1.msra.mxu0 %v402
    %1125 = vmatprep.subr.mxu0 0.0
    %1126 = vmatpush1.msra.mxu0 %v403
    %1127 = vmatprep.subr.mxu0 0.0
    %1128 = vmatpush1.msra.mxu0 %v404
    %1129 = vmatprep.subr.mxu0 0.0
    %1130 = vmatpush1.msra.mxu0 %v405
    %1131 = vmatprep.subr.mxu0 0.0
    %1132 = vmatpush1.msra.mxu0 %v406
    %1133 = vmatprep.subr.mxu0 0.0
    %1134 = vmatpush1.msra.mxu0 %v407
    %1135 = vmatprep.subr.mxu0 0.0
    %1136 = vmatpush1.msra.mxu0 %v408
    %1137 = vmatprep.subr.mxu0 0.0
    %1138 = vmatpush1.msra.mxu0 %v409
    %1139 = vmatprep.subr.mxu0 0.0
    %1140 = vmatpush1.msra.mxu0 %v410
    %1141 = vmatprep.subr.mxu0 0.0
    %1142 = vmatpush1.msra.mxu0 %v411
    %1143 = vmatprep.subr.mxu0 0.0
    %1144 = vmatpush1.msra.mxu0 %v412
    %1145 = vmatprep.subr.mxu0 0.0
    %1146 = vmatpush1.msra.mxu0 %v413
    %1147 = vmatprep.subr.mxu0 0.0
    %1148 = vmatpush1.msra.mxu0 %v414
    %1149 = vmatprep.subr.mxu0 0.0
    %1150 = vmatpush1.msra.mxu0 %v415
    %1151 = vmatprep.subr.mxu0 0.0
    %1152 = vmatpush1.msra.mxu0 %v416
    %1153 = vmatprep.subr.mxu0 0.0
    %1154 = vmatpush1.msra.mxu0 %v417
    %1155 = vmatprep.subr.mxu0 0.0
    %1156 = vmatpush1.msra.mxu0 %v418
    %1157 = vmatprep.subr.mxu0 0.0
    %1158 = vmatpush1.msra.mxu0 %v419
    %1159 = vmatprep.subr.mxu0 0.0
    %1160 = vmatpush1.msra.mxu0 %v420
    %1161 = vmatprep.subr.mxu0 0.0
    %1162 = vmatpush1.msra.mxu0 %v421
    %1163 = vmatprep.subr.mxu0 0.0
    %1164 = vmatpush1.msra.mxu0 %v422
    %1165 = vmatprep.subr.mxu0 0.0
    %1166 = vmatpush1.msra.mxu0 %v423
    %1167 = vmatprep.subr.mxu0 0.0
    %1168 = vmatpush1.msra.mxu0 %v424
    %1169 = vmatprep.subr.mxu0 0.0
    %1170 = vmatpush1.msra.mxu0 %v425
    %1171 = vmatprep.subr.mxu0 0.0
    %1172 = vmatpush1.msra.mxu0 %v426
    %1173 = vmatprep.mubr.f32.mxu0 %v50
    %1174 = vmatmul.mubr.f32.gmra.mrb[0].mxu0 %v49
    %v1175 = vpop.f32.mrb[0].mxu0
    %v1176 = vadd.f32 %v951, %v1175
    %v1177 = vpop.f32.mrb[0].mxu0
    %1178 = vmatprep.mubr.f32.mxu0 %v58
    %1179 = vmatmul.mubr.f32.gmra.mrb[0].mxu0 %v57
    %v1180 = vpop.f32.mrb[0].mxu0
    %v1181 = vadd.f32 %v956, %v1180
    %v1182 = vpop.f32.mrb[0].mxu0
    %1183 = vmatprep.mubr.f32.mxu0 %v66
    %1184 = vmatmul.mubr.f32.gmra.mrb[0].mxu0 %v65
    %v1185 = vpop.f32.mrb[0].mxu0
    %v1186 = vadd.f32 %v961, %v1185
    %v1187 = vpop.f32.mrb[0].mxu0
    %1188 = vmatprep.mubr.f32.mxu0 %v74
    %1189 = vmatmul.mubr.f32.gmra.mrb[0].mxu0 %v73
    %v1190 = vpop.f32.mrb[0].mxu0
    %v1191 = vadd.f32 %v966, %v1190
    %v1192 = vpop.f32.mrb[0].mxu0
    %1193 = vmatprep.mubr.f32.mxu0 %v82
    %1194 = vmatmul.mubr.f32.gmra.mrb[0].mxu0 %v81
    %v1195 = vpop.f32.mrb[0].mxu0
    %v1196 = vadd.f32 %v971, %v1195
    %v1197 = vpop.f32.mrb[0].mxu0
    %1198 = vmatprep.mubr.f32.mxu0 %v90
    %1199 = vmatmul.mubr.f32.gmra.mrb[0].mxu0 %v89
    %v1200 = vpop.f32.mrb[0].mxu0
    %v1201 = vadd.f32 %v976, %v1200
    %v1202 = vpop.f32.mrb[0].mxu0
    %1203 = vmatprep.mubr.f32.mxu0 %v98
    %1204 = vmatmul.mubr.f32.gmra.mrb[0].mxu0 %v97
    %v1205 = vpop.f32.mrb[0].mxu0
    %v1206 = vadd.f32 %v981, %v1205
    %v1207 = vpop.f32.mrb[0].mxu0
    %1208 = vmatprep.mubr.f32.mxu0 %v106
    %1209 = vmatmul.mubr.f32.gmra.mrb[0].mxu0 %v105
    %v1210 = vpop.f32.mrb[0].mxu0
    %v1211 = vadd.f32 %v986, %v1210
    %v1212 = vpop.f32.mrb[0].mxu0
    %1213 = vmatprep.mubr.f32.mxu0 %v114
    %1214 = vmatmul.mubr.f32.gmra.mrb[0].mxu0 %v113
    %v1215 = vpop.f32.mrb[0].mxu0
    %v1216 = vadd.f32 %v991, %v1215
    %v1217 = vpop.f32.mrb[0].mxu0
    %1218 = vmatprep.mubr.f32.mxu0 %v122
    %1219 = vmatmul.mubr.f32.gmra.mrb[0].mxu0 %v121
    %v1220 = vpop.f32.mrb[0].mxu0
    %v1221 = vadd.f32 %v996, %v1220
    %v1222 = vpop.f32.mrb[0].mxu0
    %1223 = vmatprep.mubr.f32.mxu0 %v130
    %1224 = vmatmul.mubr.f32.gmra.mrb[0].mxu0 %v129
    %v1225 = vpop.f32.mrb[0].mxu0
    %v1226 = vadd.f32 %v1001, %v1225
    %v1227 = vpop.f32.mrb[0].mxu0
    %1228 = vmatprep.mubr.f32.mxu0 %v138
    %1229 = vmatmul.mubr.f32.gmra.mrb[0].mxu0 %v137
    %v1230 = vpop.f32.mrb[0].mxu0
    %v1231 = vadd.f32 %v1006, %v1230
    %v1232 = vpop.f32.mrb[0].mxu0
    %1233 = vmatprep.mubr.f32.mxu0 %v146
    %1234 = vmatmul.mubr.f32.gmra.mrb[0].mxu0 %v145
    %v1235 = vpop.f32.mrb[0].mxu0
    %v1236 = vadd.f32 %v1011, %v1235
    %v1237 = vpop.f32.mrb[0].mxu0
    %1238 = vmatprep.mubr.f32.mxu0 %v154
    %1239 = vmatmul.mubr.f32.gmra.mrb[0].mxu0 %v153
    %v1240 = vpop.f32.mrb[0].mxu0
    %v1241 = vadd.f32 %v1016, %v1240
    %v1242 = vpop.f32.mrb[0].mxu0
    %1243 = vmatprep.mubr.f32.mxu0 %v162
    %1244 = vmatmul.mubr.f32.gmra.mrb[0].mxu0 %v161
    %v1245 = vpop.f32.mrb[0].mxu0
    %v1246 = vadd.f32 %v1021, %v1245
    %v1247 = vpop.f32.mrb[0].mxu0
    %1248 = vmatprep.mubr.f32.mxu0 %v170
    %1249 = vmatmul.mubr.f32.gmra.mrb[0].mxu0 %v169
    %v1250 = vpop.f32.mrb[0].mxu0
    %v1251 = vadd.f32 %v1026, %v1250
    %v1252 = vpop.f32.mrb[0].mxu0
    %1253 = vmatprep.mubr.f32.mxu0 %v178
    %1254 = vmatmul.mubr.f32.gmra.mrb[0].mxu0 %v177
    %v1255 = vpop.f32.mrb[0].mxu0
    %v1256 = vadd.f32 %v1031, %v1255
    %v1257 = vpop.f32.mrb[0].mxu0
    %1258 = vmatprep.mubr.f32.mxu0 %v186
    %1259 = vmatmul.mubr.f32.gmra.mrb[0].mxu0 %v185
    %v1260 = vpop.f32.mrb[0].mxu0
    %v1261 = vadd.f32 %v1036, %v1260
    %v1262 = vpop.f32.mrb[0].mxu0
    %1263 = vmatprep.mubr.f32.mxu0 %v194
    %1264 = vmatmul.mubr.f32.gmra.mrb[0].mxu0 %v193
    %v1265 = vpop.f32.mrb[0].mxu0
    %v1266 = vadd.f32 %v1041, %v1265
    %v1267 = vpop.f32.mrb[0].mxu0
    %1268 = vmatprep.mubr.f32.mxu0 %v202
    %1269 = vmatmul.mubr.f32.gmra.mrb[0].mxu0 %v201
    %v1270 = vpop.f32.mrb[0].mxu0
    %v1271 = vadd.f32 %v1046, %v1270
    %v1272 = vpop.f32.mrb[0].mxu0
    %1273 = vmatprep.mubr.f32.mxu0 %v210
    %1274 = vmatmul.mubr.f32.gmra.mrb[0].mxu0 %v209
    %v1275 = vpop.f32.mrb[0].mxu0
    %v1276 = vadd.f32 %v1051, %v1275
    %v1277 = vpop.f32.mrb[0].mxu0
    %1278 = vmatprep.mubr.f32.mxu0 %v218
    %1279 = vmatmul.mubr.f32.gmra.mrb[0].mxu0 %v217
    %v1280 = vpop.f32.mrb[0].mxu0
    %v1281 = vadd.f32 %v1056, %v1280
    %v1282 = vpop.f32.mrb[0].mxu0
    %1283 = vmatprep.mubr.f32.mxu0 %v226
    %1284 = vmatmul.mubr.f32.gmra.mrb[0].mxu0 %v225
    %v1285 = vpop.f32.mrb[0].mxu0
    %v1286 = vadd.f32 %v1061, %v1285
    %v1287 = vpop.f32.mrb[0].mxu0
    %1288 = vmatprep.mubr.f32.mxu0 %v234
    %1289 = vmatmul.mubr.f32.gmra.mrb[0].mxu0 %v233
    %v1290 = vpop.f32.mrb[0].mxu0
    %v1291 = vadd.f32 %v1066, %v1290
    %v1292 = vpop.f32.mrb[0].mxu0
    %1293 = vmatprep.mubr.f32.mxu0 %v242
    %1294 = vmatmul.mubr.f32.gmra.mrb[0].mxu0 %v241
    %v1295 = vpop.f32.mrb[0].mxu0
    %v1296 = vadd.f32 %v1071, %v1295
    %v1297 = vpop.f32.mrb[0].mxu0
    %1298 = vmatprep.mubr.f32.mxu0 %v250
    %1299 = vmatmul.mubr.f32.gmra.mrb[0].mxu0 %v249
    %v1300 = vpop.f32.mrb[0].mxu0
    %v1301 = vadd.f32 %v1076, %v1300
    %v1302 = vpop.f32.mrb[0].mxu0
    %1303 = vmatprep.mubr.f32.mxu0 %v258
    %1304 = vmatmul.mubr.f32.gmra.mrb[0].mxu0 %v257
    %v1305 = vpop.f32.mrb[0].mxu0
    %v1306 = vadd.f32 %v1081, %v1305
    %v1307 = vpop.f32.mrb[0].mxu0
    %1308 = vmatprep.mubr.f32.mxu0 %v266
    %1309 = vmatmul.mubr.f32.gmra.mrb[0].mxu0 %v265
    %v1310 = vpop.f32.mrb[0].mxu0
    %v1311 = vadd.f32 %v1086, %v1310
    %v1312 = vpop.f32.mrb[0].mxu0
    %1313 = vmatprep.mubr.f32.mxu0 %v274
    %1314 = vmatmul.mubr.f32.gmra.mrb[0].mxu0 %v273
    %v1315 = vpop.f32.mrb[0].mxu0
    %v1316 = vadd.f32 %v1091, %v1315
    %v1317 = vpop.f32.mrb[0].mxu0
    %1318 = vmatprep.mubr.f32.mxu0 %v282
    %1319 = vmatmul.mubr.f32.gmra.mrb[0].mxu0 %v281
    %v1320 = vpop.f32.mrb[0].mxu0
    %v1321 = vadd.f32 %v1096, %v1320
    %v1322 = vpop.f32.mrb[0].mxu0
    %1323 = vmatprep.mubr.f32.mxu0 %v290
    %1324 = vmatmul.mubr.f32.gmra.mrb[0].mxu0 %v289
    %v1325 = vpop.f32.mrb[0].mxu0
    %v1326 = vadd.f32 %v1101, %v1325
    %v1327 = vpop.f32.mrb[0].mxu0
    %1328 = vmatprep.mubr.f32.mxu0 %v298
    %1329 = vmatmul.mubr.f32.gmra.mrb[0].mxu0 %v297
    %v1330 = vpop.f32.mrb[0].mxu0
    %v1331 = vadd.f32 %v1106, %v1330
    %v1332 = vpop.f32.mrb[0].mxu0
    %1333 = vdwg.mxu0
    %v1334 = vpack.c.bf16 %v1181, %v1176
    %v1335 = vpack.c.bf16 %v1191, %v1186
    %v1336 = vpack.c.bf16 %v1201, %v1196
    %v1337 = vpack.c.bf16 %v1211, %v1206
    %v1338 = vpack.c.bf16 %v1221, %v1216
    %v1339 = vpack.c.bf16 %v1231, %v1226
    %v1340 = vpack.c.bf16 %v1241, %v1236
    %v1341 = vpack.c.bf16 %v1251, %v1246
    %v1342 = vpack.c.bf16 %v1261, %v1256
    %v1343 = vpack.c.bf16 %v1271, %v1266
    %v1344 = vpack.c.bf16 %v1281, %v1276
    %v1345 = vpack.c.bf16 %v1291, %v1286
    %v1346 = vpack.c.bf16 %v1301, %v1296
    %v1347 = vpack.c.bf16 %v1311, %v1306
    %v1348 = vpack.c.bf16 %v1321, %v1316
    %v1349 = vpack.c.bf16 %v1331, %v1326
    %v1366 = vunpack.c.l.b16 %v1334
    %v1367 = vunpack.c.h.b16 %v1334
    %v1368 = vunpack.c.l.b16 %v1335
    %v1369 = vunpack.c.h.b16 %v1335
    %v1370 = vunpack.c.l.b16 %v1336
    %v1371 = vunpack.c.h.b16 %v1336
    %v1372 = vunpack.c.l.b16 %v1337
    %v1373 = vunpack.c.h.b16 %v1337
    %v1374 = vunpack.c.l.b16 %v1338
    %v1375 = vunpack.c.h.b16 %v1338
    %v1376 = vunpack.c.l.b16 %v1339
    %v1377 = vunpack.c.h.b16 %v1339
    %v1378 = vunpack.c.l.b16 %v1340
    %v1379 = vunpack.c.h.b16 %v1340
    %v1380 = vunpack.c.l.b16 %v1341
    %v1381 = vunpack.c.h.b16 %v1341
    %v1382 = vunpack.c.l.b16 %v1342
    %v1383 = vunpack.c.h.b16 %v1342
    %v1384 = vunpack.c.l.b16 %v1343
    %v1385 = vunpack.c.h.b16 %v1343
    %v1386 = vunpack.c.l.b16 %v1344
    %v1387 = vunpack.c.h.b16 %v1344
    %v1388 = vunpack.c.l.b16 %v1345
    %v1389 = vunpack.c.h.b16 %v1345
    %v1390 = vunpack.c.l.b16 %v1346
    %v1391 = vunpack.c.h.b16 %v1346
    %v1392 = vunpack.c.l.b16 %v1347
    %v1393 = vunpack.c.h.b16 %v1347
    %v1394 = vunpack.c.l.b16 %v1348
    %v1395 = vunpack.c.h.b16 %v1348
    %v1396 = vunpack.c.l.b16 %v1349
    %v1397 = vunpack.c.h.b16 %v1349
    %v1398 = vpack.c.b16 %v1366, %v1366
    %v1399 = vpack.c.b16 %v1367, %v1367
    %v1400 = vpack.c.b16 %v1368, %v1368
    %v1401 = vpack.c.b16 %v1369, %v1369
    %v1402 = vpack.c.b16 %v1370, %v1370
    %v1403 = vpack.c.b16 %v1371, %v1371
    %v1404 = vpack.c.b16 %v1372, %v1372
    %v1405 = vpack.c.b16 %v1373, %v1373
    %v1406 = vpack.c.b16 %v1374, %v1374
    %v1407 = vpack.c.b16 %v1375, %v1375
    %v1408 = vpack.c.b16 %v1376, %v1376
    %v1409 = vpack.c.b16 %v1377, %v1377
    %v1410 = vpack.c.b16 %v1378, %v1378
    %v1411 = vpack.c.b16 %v1379, %v1379
    %v1412 = vpack.c.b16 %v1380, %v1380
    %v1413 = vpack.c.b16 %v1381, %v1381
    %v1414 = vpack.c.b16 %v1382, %v1382
    %v1415 = vpack.c.b16 %v1383, %v1383
    %v1416 = vpack.c.b16 %v1384, %v1384
    %v1417 = vpack.c.b16 %v1385, %v1385
    %v1418 = vpack.c.b16 %v1386, %v1386
    %v1419 = vpack.c.b16 %v1387, %v1387
    %v1420 = vpack.c.b16 %v1388, %v1388
    %v1421 = vpack.c.b16 %v1389, %v1389
    %v1422 = vpack.c.b16 %v1390, %v1390
    %v1423 = vpack.c.b16 %v1391, %v1391
    %v1424 = vpack.c.b16 %v1392, %v1392
    %v1425 = vpack.c.b16 %v1393, %v1393
    %v1426 = vpack.c.b16 %v1394, %v1394
    %v1427 = vpack.c.b16 %v1395, %v1395
    %v1428 = vpack.c.b16 %v1396, %v1396
    %v1429 = vpack.c.b16 %v1397, %v1397
    %1462 = vst [vmem:[#allocation7] sm:$0xf] %v1398
    %1463 = vst [vmem:[#allocation7 + $0x4] sm:$0xf] %v1399
    %1464 = vst [vmem:[#allocation7 + $0x8] sm:$0xf] %v1400
    %1465 = vst [vmem:[#allocation7 + $0xc] sm:$0xf] %v1401
    %1466 = vst [vmem:[#allocation7 + $0x10] sm:$0xf] %v1402
    %1467 = vst [vmem:[#allocation7 + $0x14] sm:$0xf] %v1403
    %1468 = vst [vmem:[#allocation7 + $0x18] sm:$0xf] %v1404
    %1469 = vst [vmem:[#allocation7 + $0x1c] sm:$0xf] %v1405
    %1470 = vst [vmem:[#allocation7 + $0x20] sm:$0xf] %v1406
    %1471 = vst [vmem:[#allocation7 + $0x24] sm:$0xf] %v1407
    %1472 = vst [vmem:[#allocation7 + $0x28] sm:$0xf] %v1408
    %1473 = vst [vmem:[#allocation7 + $0x2c] sm:$0xf] %v1409
    %1474 = vst [vmem:[#allocation7 + $0x30] sm:$0xf] %v1410
    %1475 = vst [vmem:[#allocation7 + $0x34] sm:$0xf] %v1411
    %1476 = vst [vmem:[#allocation7 + $0x38] sm:$0xf] %v1412
    %1477 = vst [vmem:[#allocation7 + $0x3c] sm:$0xf] %v1413
    %1478 = vst [vmem:[#allocation7 + $0x40] sm:$0xf] %v1414
    %1479 = vst [vmem:[#allocation7 + $0x44] sm:$0xf] %v1415
    %1480 = vst [vmem:[#allocation7 + $0x48] sm:$0xf] %v1416
    %1481 = vst [vmem:[#allocation7 + $0x4c] sm:$0xf] %v1417
    %1482 = vst [vmem:[#allocation7 + $0x50] sm:$0xf] %v1418
    %1483 = vst [vmem:[#allocation7 + $0x54] sm:$0xf] %v1419
    %1484 = vst [vmem:[#allocation7 + $0x58] sm:$0xf] %v1420
    %1485 = vst [vmem:[#allocation7 + $0x5c] sm:$0xf] %v1421
    %1486 = vst [vmem:[#allocation7 + $0x60] sm:$0xf] %v1422
    %1487 = vst [vmem:[#allocation7 + $0x64] sm:$0xf] %v1423
    %1488 = vst [vmem:[#allocation7 + $0x68] sm:$0xf] %v1424
    %1489 = vst [vmem:[#allocation7 + $0x6c] sm:$0xf] %v1425
    %1490 = vst [vmem:[#allocation7 + $0x70] sm:$0xf] %v1426
    %1491 = vst [vmem:[#allocation7 + $0x74] sm:$0xf] %v1427
    %1492 = vst [vmem:[#allocation7 + $0x78] sm:$0xf] %v1428
    %1493 = vst [vmem:[#allocation7 + $0x7c] sm:$0xf] %v1429
    // Predicated region
    $region22: #{tpu_custom_call.1} parent=1 // pred_check
      _
    $region23: #{tpu_custom_call.1} parent=1 // pred_check_branch
      %1495 = sbr.rel (0) target = $region25
    $region24: #{tpu_custom_call.1} parent=1 // pred_region
      %s1497 = ssub.s32 2048, 2048
      %1498 = vsyncadd [#allocation4], %s1497
      %s1499 = sshll.u32 [#allocation7], 4
      %s1500 = int_to_ptr.vmem [resolvable:$true] %s1499
      %1505 = dma.vmem_to_hbm [thread:$0]  %s1500, 2048, %s3, [#allocation4], 64, 64, 4
    $region25: #{tpu_custom_call.1} parent=1 // pred_fallthru
      _
    // Predicated region
    $region26: #{tpu_custom_call.1} parent=1 // pred_check
      _
    $region27: #{tpu_custom_call.1} parent=1 // pred_check_branch
      %1507 = sbr.rel (0) target = $region29
    $region28: #{tpu_custom_call.1} parent=1 // pred_region
      %1508 = dma.done [#allocation4], 2048
    $region29: #{tpu_custom_call.1} parent=1 // pred_fallthru
      _
    %1509 = vsyncpa [#allocation3], 1
    %1510 = vsyncpa [#allocation6], 1
    %1511 = vsyncpa [#allocation4], 1

</llo_original>
